<compile_context>
chip_gen: v5e
topology: v5e:2x2
jax: 0.10.0
libtpu: 0.0.40
codegen_flags: <defaults>
</compile_context>

<pallas_src>
import functools

import numpy as np

import jax
import jax.numpy as jnp
from jax import lax
from jax.experimental import pallas as pl
from jax.experimental.pallas import tpu as pltpu


NEG_MASK = -1e30  # non-edge marker folded into the edge-bias matrix


def _round_up(x, m):
    return ((x + m - 1) // m) * m


def _full_spec(shape):
    nd = len(shape)
    return pl.BlockSpec(shape, lambda i, _nd=nd: (0,) * _nd)


# --------------------------------------------------------------------------
# Kernel 1: one WSWGAT layer (masked additive GAT + residual FFN), tiled over
# destination rows with an online softmax over source tiles.
# --------------------------------------------------------------------------
def gat_layer_kernel(src_ref, dst_ref, eb_ref,
                     ws_ref, vsrc_ref, vdst_ref,
                     wf1_ref, bf1_ref, wf2_ref, bf2_ref,
                     out_ref, m_scr, l_scr, acc_scr):
    bf16 = jnp.bfloat16
    si = pl.program_id(1)
    n_src = pl.num_programs(1)

    @pl.when(si == 0)
    def _():
        m_scr[...] = jnp.full(m_scr.shape, NEG_MASK, m_scr.dtype)
        l_scr[...] = jnp.zeros(l_scr.shape, l_scr.dtype)
        acc_scr[...] = jnp.zeros(acc_scr.shape, acc_scr.dtype)

    src = src_ref[...]                                         # [TS, D] f32
    dst = dst_ref[...]                                         # [TD, D] f32
    eb = eb_ref[...].astype(jnp.float32)                       # [TD, TS]
    mask = eb > -1e29                                          # recover adjacency

    # src feature projection (still needed for the attention matmul)
    h_s = jnp.dot(src.astype(bf16), ws_ref[...],
                  preferred_element_type=jnp.float32)          # [TS, D]

    # folded additive-attention logits (no h_d projection, no N=1 matmul for e_d)
    e_d = jnp.sum(dst * vdst_ref[...], axis=-1, keepdims=True)           # [TD, 1]
    e_s = lax.dot_general(vsrc_ref[...], src, (((1,), (1,)), ((), ())),
                          preferred_element_type=jnp.float32)            # [1, TS]
    logits = e_d + e_s + eb
    logits = jnp.where(logits > 0, logits, 0.2 * logits)                 # LeakyReLU(0.2)
    logits = jnp.where(mask, logits, NEG_MASK)

    # online softmax over source tiles
    m_prev = m_scr[...]
    m_new = jnp.maximum(m_prev, jnp.max(logits, axis=-1, keepdims=True))
    p = jnp.where(mask, jnp.exp(logits - m_new), 0.0)
    corr = jnp.exp(m_prev - m_new)
    l_scr[...] = corr * l_scr[...] + jnp.sum(p, axis=-1, keepdims=True)
    acc_scr[...] = corr * acc_scr[...] + jnp.dot(
        p.astype(bf16), h_s.astype(bf16), preferred_element_type=jnp.float32)
    m_scr[...] = m_new

    # epilogue: normalize, ELU, residual position-wise FFN
    @pl.when(si == n_src - 1)
    def _():
        denom = jnp.maximum(l_scr[...], 1e-9)                  # no-neighbor guard
        attn = acc_scr[...] * pl.reciprocal(denom, approx=True)
        attn = jnp.where(attn > 0, attn,
                         jnp.exp(jnp.minimum(attn, 0.0)) - 1.0)          # ELU (overflow-safe)
        hid = jnp.maximum(
            jnp.dot(attn.astype(bf16), wf1_ref[...],
                    preferred_element_type=jnp.float32) + bf1_ref[...], 0.0)
        out_ref[...] = attn + jnp.dot(hid.astype(bf16), wf2_ref[...],
                                      preferred_element_type=jnp.float32) + bf2_ref[...]


def gat_layer(src_feat, dst_feat, ebias_bf16, fp):
    """One WSWGAT layer. src/dst features f32 [N,D] (N multiple of 128),
    ebias bf16 [Nd, Ns] with -1e30 on non-edges / padding."""
    Ns, D = src_feat.shape
    Nd = dst_feat.shape[0]
    Dff = fp["w_ff1"].shape[1]
    TS = 512 if Ns % 512 == 0 else (256 if Ns % 256 == 0 else 128)
    TD = 256 if Nd % 256 == 0 else 128
    grid = (Nd // TD, Ns // TS)
    in_specs = [
        pl.BlockSpec((TS, D), lambda di, si: (si, 0)),       # src features
        pl.BlockSpec((TD, D), lambda di, si: (di, 0)),       # dst features
        pl.BlockSpec((TD, TS), lambda di, si: (di, si)),     # bf16 edge bias (mask folded)
        pl.BlockSpec((D, D), lambda di, si: (0, 0)),         # W_src (bf16)
        pl.BlockSpec((1, D), lambda di, si: (0, 0)),         # v_src = (W_src @ a_src^T)^T
        pl.BlockSpec((1, D), lambda di, si: (0, 0)),         # v_dst = (W_dst @ a_dst)^T
        pl.BlockSpec((D, Dff), lambda di, si: (0, 0)),       # FFN weights / biases
        pl.BlockSpec((1, Dff), lambda di, si: (0, 0)),
        pl.BlockSpec((Dff, D), lambda di, si: (0, 0)),
        pl.BlockSpec((1, D), lambda di, si: (0, 0)),
    ]
    return pl.pallas_call(
        gat_layer_kernel,
        out_shape=jax.ShapeDtypeStruct((Nd, D), jnp.float32),
        grid=grid,
        in_specs=in_specs,
        out_specs=pl.BlockSpec((TD, D), lambda di, si: (di, 0)),
        scratch_shapes=[pltpu.VMEM((TD, 1), jnp.float32),
                        pltpu.VMEM((TD, 1), jnp.float32),
                        pltpu.VMEM((TD, D), jnp.float32)],
        compiler_params=pltpu.CompilerParams(
            dimension_semantics=("parallel", "arbitrary"),
            vmem_limit_bytes=32 * 1024 * 1024),
    )(src_feat, dst_feat, ebias_bf16, fp["w_src"], fp["v_src"], fp["v_dst"],
      fp["w_ff1"], fp["b_ff1"], fp["w_ff2"], fp["b_ff2"])


def _fold_gat_params(p):
    f32 = jnp.float32
    v_src = jnp.dot(p["w_src"].astype(f32), p["a_src"].astype(f32).T).T   # [1, D]
    v_dst = jnp.dot(p["w_dst"].astype(f32), p["a_dst"].astype(f32)).T     # [1, D]
    return dict(w_src=p["w_src"], v_src=v_src, v_dst=v_dst,
                w_ff1=p["w_ff1"], b_ff1=p["b_ff1"],
                w_ff2=p["w_ff2"], b_ff2=p["b_ff2"])


def gat_forward(ins_feat, ing_feat, ebias_ins_ing, p_ing2ins, p_ins2ing, n_iter):
    Nins, D = ins_feat.shape
    Ning = ing_feat.shape[0]
    Nip = _round_up(Nins, 128)
    Ngp = _round_up(Ning, 128)

    ins_p = jnp.pad(ins_feat, ((0, Nip - Nins), (0, 0)))
    ing_p = jnp.pad(ing_feat, ((0, Ngp - Ning), (0, 0)))
    eb_ii = jnp.pad(ebias_ins_ing, ((0, Nip - Nins), (0, Ngp - Ning)),
                    constant_values=NEG_MASK).astype(jnp.bfloat16)   # dst=ins, src=ing
    eb_gi = eb_ii.T                                                  # dst=ing, src=ins

    wa = _fold_gat_params(p_ing2ins)
    wb = _fold_gat_params(p_ins2ing)

    ins_state = gat_layer(ing_p, ins_p, eb_ii, wa)                   # ing2ins
    for _ in range(n_iter):
        ing_state = gat_layer(ins_state, ing_p, eb_gi, wb)           # ins2ing
        ins_state = gat_layer(ing_state, ins_state, eb_ii, wa)       # ing2ins
    return ins_state[:Nins]


# --------------------------------------------------------------------------
# Kernel 2: length-masked unidirectional LSTM over a batch tile of recipes.
#   - one prologue matmul for the input projection (bf16 gx scratch)
#   - h/c/mean-accumulator carried in vregs through lax.fori_loop
#   - text_lstm_proj hoisted into ONE epilogue matmul over the hidden history
#   - per-recipe mean = proj(mean(h)) (affine identity)
# --------------------------------------------------------------------------
def temporal_kernel(x_ref, len_ref, wih_ref, whh_ref, b_ref,
                    wproj_ref, bproj_ref,
                    y_ref, mean_ref,
                    gx_scr, hh_scr, *, T, TB):
    bf16 = jnp.bfloat16
    f32 = jnp.float32
    D = x_ref.shape[2]
    H = whh_ref.shape[0]
    Dp = wproj_ref.shape[1]

    # prologue: x @ W_ih for ALL timesteps of this batch tile in one matmul
    x2 = x_ref[...].reshape(T * TB, D)
    gx_scr[...] = jnp.dot(x2.astype(bf16), wih_ref[...],
                          preferred_element_type=f32).astype(bf16)

    lens = len_ref[...]                                  # [TB, 1] int32
    bias = b_ref[...]                                    # [1, 4H] f32

    def step(t, carry):
        h, c, acc = carry
        base = pl.multiple_of(t * TB, TB)
        gates = (gx_scr[pl.ds(base, TB), :].astype(f32) + bias
                 + jnp.dot(h.astype(bf16), whh_ref[...],
                           preferred_element_type=f32))            # [TB, 4H]
        i_g = jax.nn.sigmoid(gates[:, 0 * H:1 * H])
        f_g = jax.nn.sigmoid(gates[:, 1 * H:2 * H])
        g_g = jnp.tanh(gates[:, 2 * H:3 * H])
        o_g = jax.nn.sigmoid(gates[:, 3 * H:4 * H])
        c_new = f_g * c + i_g * g_g
        h_new = o_g * jnp.tanh(c_new)
        valid = lens > t
        h = jnp.where(valid, h_new, h)
        c = jnp.where(valid, c_new, c)
        acc = acc + jnp.where(valid, h, 0.0)
        hh_scr[pl.ds(base, TB), :] = h.astype(bf16)
        return (h, c, acc)

    zeros = jnp.zeros((TB, H), f32)
    _, _, acc = lax.fori_loop(0, T, step, (zeros, zeros, zeros),
                              unroll=max(1, min(T, 4)))

    # epilogue: ONE text_lstm_proj matmul over the whole hidden history
    proj = (jnp.dot(hh_scr[...], wproj_ref[...],
                    preferred_element_type=f32) + bproj_ref[...])   # [T*TB, Dp]
    y_ref[...] = proj.reshape(T, TB, Dp)

    cnt = jnp.maximum(lens.astype(f32), 1.0)                        # empty-recipe guard
    h_mean = acc / cnt
    mean_ref[...] = (jnp.dot(h_mean.astype(bf16), wproj_ref[...],
                             preferred_element_type=f32) + bproj_ref[...])


def temporal_forward(x_tm, lens, params, T, B, TB):
    D = x_tm.shape[2]
    H = params["lstm"]["w_hh"].shape[0]
    Dp = params["proj_w"].shape[1]
    kern = functools.partial(temporal_kernel, T=T, TB=TB)
    return pl.pallas_call(
        kern,
        out_shape=(jax.ShapeDtypeStruct((T, B, Dp), jnp.float32),
                   jax.ShapeDtypeStruct((B, Dp), jnp.float32)),
        grid=(B // TB,),
        in_specs=[
            pl.BlockSpec((T, TB, D), lambda bi: (0, bi, 0)),     # packed instructions
            pl.BlockSpec((TB, 1), lambda bi: (bi, 0)),           # per-recipe lengths
            pl.BlockSpec((D, 4 * H), lambda bi: (0, 0)),         # W_ih
            pl.BlockSpec((H, 4 * H), lambda bi: (0, 0)),         # W_hh
            pl.BlockSpec((1, 4 * H), lambda bi: (0, 0)),         # lstm bias
            pl.BlockSpec((H, Dp), lambda bi: (0, 0)),            # proj W
            pl.BlockSpec((1, Dp), lambda bi: (0, 0)),            # proj b
        ],
        out_specs=(pl.BlockSpec((T, TB, Dp), lambda bi: (0, bi, 0)),
                   pl.BlockSpec((TB, Dp), lambda bi: (bi, 0))),
        scratch_shapes=[pltpu.VMEM((T * TB, 4 * H), jnp.bfloat16),   # input-proj history
                        pltpu.VMEM((T * TB, H), jnp.bfloat16)],      # hidden history
        compiler_params=pltpu.CompilerParams(
            dimension_semantics=("parallel",),
            vmem_limit_bytes=48 * 1024 * 1024),
    )(x_tm, lens, params["lstm"]["w_ih"], params["lstm"]["w_hh"],
      params["lstm"]["b"], params["proj_w"], params["proj_b"])


# --------------------------------------------------------------------------
# Kernel 3: tiny linear layer (title_feat_proj)
# --------------------------------------------------------------------------
def linear_kernel(x_ref, w_ref, b_ref, o_ref):
    o_ref[...] = (jnp.dot(x_ref[...].astype(jnp.bfloat16), w_ref[...],
                          preferred_element_type=jnp.float32) + b_ref[...])


def linear_forward(x, w, b):
    N, _ = x.shape
    Dout = w.shape[1]
    args = (x, w, b)
    return pl.pallas_call(
        linear_kernel,
        out_shape=jax.ShapeDtypeStruct((N, Dout), jnp.float32),
        grid=(1,),
        in_specs=[_full_spec(a.shape) for a in args],
        out_specs=_full_spec((N, Dout)),
    )(*args)


# --------------------------------------------------------------------------
# parameters (matmul weights in bf16; biases / attention vectors in f32)
# --------------------------------------------------------------------------
def init_params(key, D=128, H=128, Dff=256, n_buckets=10, De=16):
    ks = iter(jax.random.split(key, 32))

    def w(shape, fan_in, dtype=jnp.bfloat16):
        return (jax.random.normal(next(ks), shape, jnp.float32)
                / jnp.sqrt(jnp.float32(fan_in))).astype(dtype)

    def gat_params():
        return dict(
            w_src=w((D, D), D), w_dst=w((D, D), D),
            a_src=w((1, D), D, jnp.float32), a_dst=w((D, 1), D, jnp.float32),
            w_ff1=w((D, Dff), D), b_ff1=jnp.zeros((1, Dff), jnp.float32),
            w_ff2=w((Dff, D), Dff), b_ff2=jnp.zeros((1, D), jnp.float32),
        )

    params = {
        "ing2ins": gat_params(),
        "ins2ing": gat_params(),
        "tf_embed": w((n_buckets, De), De, jnp.float32),   # nn.Embedding for tffrac
        "tf_proj": w((De,), De, jnp.float32),              # edge embedding -> scalar bias
        "lstm": dict(w_ih=w((D, 4 * H), D), w_hh=w((H, 4 * H), H),
                     b=jnp.zeros((1, 4 * H), jnp.float32)),
        "proj_w": w((H, D), H), "proj_b": jnp.zeros((1, D), jnp.float32),
        "title_w": w((D, D), D), "title_b": jnp.zeros((1, D), jnp.float32),
    }
    return params


# --------------------------------------------------------------------------
# forward pass (thin JAX glue; hot paths are the Pallas kernels above)
# --------------------------------------------------------------------------
def recipe_encoder_forward(params, instruction_feature, ingredients_feature,
                           title_feature, adj_ins_ing, tf_bucket,
                           recipe_img_pos, n_iter=1):
    # init_heterogeneous_graph: per-bucket scalar bias (tf_embed @ tf_proj),
    # gathered per edge; adjacency mask folded in as -1e30 (no separate adj).
    bucket_bias = jnp.dot(params["tf_embed"], params["tf_proj"])     # [n_buckets]
    ebias = bucket_bias[tf_bucket]                                   # [Nins, Ning]
    ebias = jnp.where(adj_ins_ing > 0, ebias, NEG_MASK)

    # GAT_forward: 1 + 2*n_iter tiled WSWGAT layer kernels
    ins_state = gat_forward(instruction_feature, ingredients_feature,
                            ebias, params["ing2ins"], params["ins2ing"], n_iter)

    # encode_text_temporal_info (is_shuffle = False default)
    R = len(recipe_img_pos)
    lengths = [hi - lo for lo, hi in recipe_img_pos]
    T = max(lengths)

    if R <= 64:
        RP = _round_up(R, 16)
        TB = RP
    else:
        RP = _round_up(R, 64)
        TB = 64

    # pack instruction rows into a time-major [T, RP, D] tensor with ONE gather
    offs = np.array([lo for lo, _ in recipe_img_pos] + [0] * (RP - R), np.int32)
    lens_np = np.array(lengths + [0] * (RP - R), np.int32)
    t_ids = np.arange(T, dtype=np.int32)[:, None]
    gidx = offs[None, :] + np.minimum(t_ids, np.maximum(lens_np[None, :] - 1, 0))
    valid = (t_ids < lens_np[None, :]).astype(np.float32)
    # TODO(synk): replace this gather with an in-kernel scalar-prefetched row
    # gather (PrefetchScalarGridSpec + pl.Element) to avoid the HBM round trip.
    x_tm = jnp.take(ins_state, jnp.asarray(gidx), axis=0) * jnp.asarray(valid)[:, :, None]
    lens_arr = jnp.asarray(lens_np.reshape(RP, 1))

    # TODO(synk): text_lstm may be bidirectional in the config; only the
    # forward direction is implemented here.
    y, means = temporal_forward(x_tm, lens_arr, params, T, RP, TB)

    # per-recipe slices straight from the time-major output (no full transpose)
    feats = [y[:L, r, :] for r, L in enumerate(lengths)]
    mean_list = [means[r] for r in range(R)]

    title_out = linear_forward(title_feature, params["title_w"], params["title_b"])

    # key renaming text -> instruction, shuffle branch is None (is_shuffle=False)
    output = {
        "instruction_feature_mean": mean_list,
        "instruction_features": feats,
        "instruction_shuffle_features_mean": None,
        "instruction_shuffle_features_label": None,
        "title_feature": title_out,
    }
    return output


# --------------------------------------------------------------------------
# main
# --------------------------------------------------------------------------
if __name__ == "__main__":
    D = 128
    N_INS, N_ING = 8, 8
    recipe_img_pos = [(0, 4), (4, 8)]          # 2 recipes, 4 instructions each

    key = jax.random.PRNGKey(0)
    k_ins, k_ing, k_ttl = jax.random.split(key, 3)
    instruction_feature = jax.random.normal(k_ins, (N_INS, D), jnp.float32)
    ingredients_feature = jax.random.normal(k_ing, (N_ING, D), jnp.float32)
    title_feature = jax.random.normal(k_ttl, (2, D), jnp.float32)

    # deterministic dense bipartite graph (instruction x ingredient) + tf buckets
    adj_np = np.array([[1.0 if (i + j) % 3 != 0 else 0.0 for j in range(N_ING)]
                       for i in range(N_INS)], np.float32)
    bucket_np = np.array([[(i * 3 + j * 7) % 10 for j in range(N_ING)]
                          for i in range(N_INS)], np.int32)
    adj_ins_ing = jnp.asarray(adj_np)
    tf_bucket = jnp.asarray(bucket_np)

    params = init_params(jax.random.PRNGKey(42), D=D)

    out = recipe_encoder_forward(params, instruction_feature,
                                 ingredients_feature, title_feature,
                                 adj_ins_ing, tf_bucket, recipe_img_pos,
                                 n_iter=1)
    jax.block_until_ready(out)

    assert out["title_feature"].shape == (2, D)
    assert out["instruction_features"][0].shape == (4, D)
    assert out["instruction_feature_mean"][0].shape == (D,)
    assert all(bool(jnp.isfinite(m).all()) for m in out["instruction_feature_mean"])
    assert bool(jnp.isfinite(out["title_feature"]).all())
    print("KERNEL_OK")
</pallas_src>

<mosaic_0001>
module attributes {stable_mosaic.version = 11 : i64} {
  func.func @gat_layer_kernel(%arg0: i32, %arg1: i32, %arg2: memref<128x128xf32, #tpu.memory_space<vmem>>, %arg3: memref<128x128xf32, #tpu.memory_space<vmem>>, %arg4: memref<128x128xbf16, #tpu.memory_space<vmem>>, %arg5: memref<128x128xbf16, #tpu.memory_space<vmem>>, %arg6: memref<1x128xf32, #tpu.memory_space<vmem>>, %arg7: memref<1x128xf32, #tpu.memory_space<vmem>>, %arg8: memref<128x256xbf16, #tpu.memory_space<vmem>>, %arg9: memref<1x256xf32, #tpu.memory_space<vmem>>, %arg10: memref<256x128xbf16, #tpu.memory_space<vmem>>, %arg11: memref<1x128xf32, #tpu.memory_space<vmem>>, %arg12: memref<128x128xf32, #tpu.memory_space<vmem>>, %arg13: memref<128x1xf32, #tpu.memory_space<vmem>>, %arg14: memref<128x1xf32, #tpu.memory_space<vmem>>, %arg15: memref<128x128xf32, #tpu.memory_space<vmem>>) attributes {dimension_semantics = [#tpu.dimension_semantics<parallel>, #tpu.dimension_semantics<arbitrary>], iteration_bounds = array<i64: 1, 1>, scalar_prefetch = 0 : i64, scratch_operands = 3 : i64, tpu.core_type = #tpu.core_type<tc>, window_params = [{transform_indices = @transform_0, window_bounds = array<i64: 128, 128>}, {transform_indices = @transform_1, window_bounds = array<i64: 128, 128>}, {transform_indices = @transform_2, window_bounds = array<i64: 128, 128>}, {pipeline_mode = #tpu.pipeline_mode<synchronous>, transform_indices = @transform_3, window_bounds = array<i64: 128, 128>}, {pipeline_mode = #tpu.pipeline_mode<synchronous>, transform_indices = @transform_4, window_bounds = array<i64: 1, 128>}, {pipeline_mode = #tpu.pipeline_mode<synchronous>, transform_indices = @transform_5, window_bounds = array<i64: 1, 128>}, {pipeline_mode = #tpu.pipeline_mode<synchronous>, transform_indices = @transform_6, window_bounds = array<i64: 128, 256>}, {pipeline_mode = #tpu.pipeline_mode<synchronous>, transform_indices = @transform_7, window_bounds = array<i64: 1, 256>}, {pipeline_mode = #tpu.pipeline_mode<synchronous>, transform_indices = @transform_8, window_bounds = array<i64: 256, 128>}, {pipeline_mode = #tpu.pipeline_mode<synchronous>, transform_indices = @transform_9, window_bounds = array<i64: 1, 128>}, {transform_indices = @transform_10, window_bounds = array<i64: 128, 128>}]} {
    %c0_i32 = arith.constant 0 : i32
    %0 = arith.cmpi eq, %arg1, %c0_i32 : i32
    %1 = arith.extui %0 : i1 to i32
    %c0_i32_0 = arith.constant 0 : i32
    %2 = arith.cmpi ne, %1, %c0_i32_0 : i32
    scf.if %2 {
      %cst_36 = arith.constant -1.000000e+30 : f32
      %59 = vector.broadcast %cst_36 : f32 to vector<128x1xf32>
      %c0_37 = arith.constant 0 : index
      %c0_38 = arith.constant 0 : index
      %60 = vector.load %arg13[%c0_37, %c0_38] : memref<128x1xf32, #tpu.memory_space<vmem>>, vector<128x1xf32>
      tpu.vector_store %arg13[%c0_37, %c0_38], %59 {strides = array<i32>} : memref<128x1xf32, #tpu.memory_space<vmem>>, vector<128x1xf32>,
      %cst_39 = arith.constant 0.000000e+00 : f32
      %61 = vector.broadcast %cst_39 : f32 to vector<128x1xf32>
      %c0_40 = arith.constant 0 : index
      %c0_41 = arith.constant 0 : index
      %62 = vector.load %arg14[%c0_40, %c0_41] : memref<128x1xf32, #tpu.memory_space<vmem>>, vector<128x1xf32>
      tpu.vector_store %arg14[%c0_40, %c0_41], %61 {strides = array<i32>} : memref<128x1xf32, #tpu.memory_space<vmem>>, vector<128x1xf32>,
      %cst_42 = arith.constant 0.000000e+00 : f32
      %63 = vector.broadcast %cst_42 : f32 to vector<128x128xf32>
      %c0_43 = arith.constant 0 : index
      %c0_44 = arith.constant 0 : index
      %64 = vector.load %arg15[%c0_43, %c0_44] : memref<128x128xf32, #tpu.memory_space<vmem>>, vector<128x128xf32>
      tpu.vector_store %arg15[%c0_43, %c0_44], %63 {strides = array<i32>} : memref<128x128xf32, #tpu.memory_space<vmem>>, vector<128x128xf32>,
    } else {
    }
    %c0 = arith.constant 0 : index
    %c0_1 = arith.constant 0 : index
    %3 = vector.load %arg2[%c0, %c0_1] : memref<128x128xf32, #tpu.memory_space<vmem>>, vector<128x128xf32>
    %c0_2 = arith.constant 0 : index
    %c0_3 = arith.constant 0 : index
    %4 = vector.load %arg3[%c0_2, %c0_3] : memref<128x128xf32, #tpu.memory_space<vmem>>, vector<128x128xf32>
    %c0_4 = arith.constant 0 : index
    %c0_5 = arith.constant 0 : index
    %5 = vector.load %arg4[%c0_4, %c0_5] : memref<128x128xbf16, #tpu.memory_space<vmem>>, vector<128x128xbf16>
    %6 = arith.extf %5 : vector<128x128xbf16> to vector<128x128xf32>
    %cst = arith.constant -1.000000e+29 : f32
    %7 = vector.broadcast %cst : f32 to vector<128x128xf32>
    %8 = arith.cmpf ogt, %6, %7 : vector<128x128xf32>
    %9 = arith.truncf %3 : vector<128x128xf32> to vector<128x128xbf16>
    %c0_6 = arith.constant 0 : index
    %c0_7 = arith.constant 0 : index
    %10 = vector.load %arg5[%c0_6, %c0_7] : memref<128x128xbf16, #tpu.memory_space<vmem>>, vector<128x128xbf16>
    %cst_8 = arith.constant dense<0.000000e+00> : vector<128x128xf32>
    %11 = tpu.matmul %9, %10, %cst_8 {dimension_numbers = #tpu.dot_dimension_numbers<[1], [0], [0], [1], [0, 0, 1, 1], [], []>} : vector<128x128xbf16>, vector<128x128xbf16>, vector<128x128xf32> -> vector<128x128xf32>
    %c0_9 = arith.constant 0 : index
    %c0_10 = arith.constant 0 : index
    %12 = vector.load %arg7[%c0_9, %c0_10] : memref<1x128xf32, #tpu.memory_space<vmem>>, vector<1x128xf32>
    %13 = vector.broadcast %12 : vector<1x128xf32> to vector<128x128xf32>
    %14 = arith.mulf %4, %13 : vector<128x128xf32>
    %cst_11 = arith.constant dense<0.000000e+00> : vector<128xf32>
    %15 = vector.multi_reduction <add>, %14, %cst_11 [1] : vector<128x128xf32> to vector<128xf32>
    %16 = vector.shape_cast %15 : vector<128xf32> to vector<128x1xf32>
    %c0_12 = arith.constant 0 : index
    %c0_13 = arith.constant 0 : index
    %17 = vector.load %arg6[%c0_12, %c0_13] : memref<1x128xf32, #tpu.memory_space<vmem>>, vector<1x128xf32>
    %cst_14 = arith.constant dense<0.000000e+00> : vector<1x128xf32>
    %18 = tpu.matmul %17, %3, %cst_14 {dimension_numbers = #tpu.dot_dimension_numbers<[1], [1], [0], [0], [0, 0, 1, 0], [], []>} : vector<1x128xf32>, vector<128x128xf32>, vector<1x128xf32> -> vector<1x128xf32>
    %19 = vector.broadcast %16 : vector<128x1xf32> to vector<128x128xf32>
    %20 = vector.broadcast %18 : vector<1x128xf32> to vector<128x128xf32>
    %21 = arith.addf %19, %20 : vector<128x128xf32>
    %22 = arith.addf %21, %6 : vector<128x128xf32>
    %cst_15 = arith.constant 0.000000e+00 : f32
    %23 = vector.broadcast %cst_15 : f32 to vector<128x128xf32>
    %24 = arith.cmpf ogt, %22, %23 : vector<128x128xf32>
    %cst_16 = arith.constant 2.000000e-01 : f32
    %25 = vector.broadcast %cst_16 : f32 to vector<128x128xf32>
    %26 = arith.mulf %25, %22 : vector<128x128xf32>
    %27 = arith.select %24, %22, %26 : vector<128x128xi1>, vector<128x128xf32>
    %cst_17 = arith.constant -1.000000e+30 : f32
    %28 = vector.broadcast %cst_17 : f32 to vector<128x128xf32>
    %29 = arith.select %8, %27, %28 : vector<128x128xi1>, vector<128x128xf32>
    %c0_18 = arith.constant 0 : index
    %c0_19 = arith.constant 0 : index
    %30 = vector.load %arg13[%c0_18, %c0_19] : memref<128x1xf32, #tpu.memory_space<vmem>>, vector<128x1xf32>
    %cst_20 = arith.constant dense<0xFF800000> : vector<128xf32>
    %31 = vector.multi_reduction <maximumf>, %29, %cst_20 [1] : vector<128x128xf32> to vector<128xf32>
    %32 = vector.shape_cast %31 : vector<128xf32> to vector<128x1xf32>
    %33 = arith.maximumf %30, %32 : vector<128x1xf32>
    %34 = vector.broadcast %33 : vector<128x1xf32> to vector<128x128xf32>
    %35 = arith.subf %29, %34 : vector<128x128xf32>
    %36 = math.exp %35 : vector<128x128xf32>
    %cst_21 = arith.constant 0.000000e+00 : f32
    %37 = vector.broadcast %cst_21 : f32 to vector<128x128xf32>
    %38 = arith.select %8, %36, %37 : vector<128x128xi1>, vector<128x128xf32>
    %39 = arith.subf %30, %33 : vector<128x1xf32>
    %40 = math.exp %39 : vector<128x1xf32>
    %c0_22 = arith.constant 0 : index
    %c0_23 = arith.constant 0 : index
    %41 = vector.load %arg14[%c0_22, %c0_23] : memref<128x1xf32, #tpu.memory_space<vmem>>, vector<128x1xf32>
    %42 = arith.mulf %40, %41 : vector<128x1xf32>
    %cst_24 = arith.constant dense<0.000000e+00> : vector<128xf32>
    %43 = vector.multi_reduction <add>, %38, %cst_24 [1] : vector<128x128xf32> to vector<128xf32>
    %44 = vector.shape_cast %43 : vector<128xf32> to vector<128x1xf32>
    %45 = arith.addf %42, %44 : vector<128x1xf32>
    %c0_25 = arith.constant 0 : index
    %c0_26 = arith.constant 0 : index
    %46 = vector.load %arg14[%c0_25, %c0_26] : memref<128x1xf32, #tpu.memory_space<vmem>>, vector<128x1xf32>
    tpu.vector_store %arg14[%c0_25, %c0_26], %45 {strides = array<i32>} : memref<128x1xf32, #tpu.memory_space<vmem>>, vector<128x1xf32>,
    %c0_27 = arith.constant 0 : index
    %c0_28 = arith.constant 0 : index
    %47 = vector.load %arg15[%c0_27, %c0_28] : memref<128x128xf32, #tpu.memory_space<vmem>>, vector<128x128xf32>
    %48 = vector.broadcast %40 : vector<128x1xf32> to vector<128x128xf32>
    %49 = arith.mulf %48, %47 : vector<128x128xf32>
    %50 = arith.truncf %38 : vector<128x128xf32> to vector<128x128xbf16>
    %51 = arith.truncf %11 : vector<128x128xf32> to vector<128x128xbf16>
    %cst_29 = arith.constant dense<0.000000e+00> : vector<128x128xf32>
    %52 = tpu.matmul %50, %51, %cst_29 {dimension_numbers = #tpu.dot_dimension_numbers<[1], [0], [0], [1], [0, 0, 1, 1], [], []>} : vector<128x128xbf16>, vector<128x128xbf16>, vector<128x128xf32> -> vector<128x128xf32>
    %53 = arith.addf %49, %52 : vector<128x128xf32>
    %c0_30 = arith.constant 0 : index
    %c0_31 = arith.constant 0 : index
    %54 = vector.load %arg15[%c0_30, %c0_31] : memref<128x128xf32, #tpu.memory_space<vmem>>, vector<128x128xf32>
    tpu.vector_store %arg15[%c0_30, %c0_31], %53 {strides = array<i32>} : memref<128x128xf32, #tpu.memory_space<vmem>>, vector<128x128xf32>,
    %c0_32 = arith.constant 0 : index
    %c0_33 = arith.constant 0 : index
    %55 = vector.load %arg13[%c0_32, %c0_33] : memref<128x1xf32, #tpu.memory_space<vmem>>, vector<128x1xf32>
    tpu.vector_store %arg13[%c0_32, %c0_33], %33 {strides = array<i32>} : memref<128x1xf32, #tpu.memory_space<vmem>>, vector<128x1xf32>,
    %c0_i32_34 = arith.constant 0 : i32
    %56 = arith.cmpi eq, %arg1, %c0_i32_34 : i32
    %57 = arith.extui %56 : i1 to i32
    %c0_i32_35 = arith.constant 0 : i32
    %58 = arith.cmpi ne, %57, %c0_i32_35 : i32
    scf.if %58 {
      %c0_36 = arith.constant 0 : index
      %c0_37 = arith.constant 0 : index
      %59 = vector.load %arg14[%c0_36, %c0_37] : memref<128x1xf32, #tpu.memory_space<vmem>>, vector<128x1xf32>
      %cst_38 = arith.constant 9.99999971E-10 : f32
      %60 = vector.broadcast %cst_38 : f32 to vector<128x1xf32>
      %61 = arith.maximumf %59, %60 : vector<128x1xf32>
      %c0_39 = arith.constant 0 : index
      %c0_40 = arith.constant 0 : index
      %62 = vector.load %arg15[%c0_39, %c0_40] : memref<128x128xf32, #tpu.memory_space<vmem>>, vector<128x128xf32>
      %63 = tpu.reciprocal %61 {approx = true} : vector<128x1xf32> -> vector<128x1xf32>
      %64 = vector.broadcast %63 : vector<128x1xf32> to vector<128x128xf32>
      %65 = arith.mulf %62, %64 : vector<128x128xf32>
      %cst_41 = arith.constant 0.000000e+00 : f32
      %66 = vector.broadcast %cst_41 : f32 to vector<128x128xf32>
      %67 = arith.cmpf ogt, %65, %66 : vector<128x128xf32>
      %cst_42 = arith.constant 0.000000e+00 : f32
      %68 = vector.broadcast %cst_42 : f32 to vector<128x128xf32>
      %69 = arith.minimumf %65, %68 : vector<128x128xf32>
      %70 = math.exp %69 : vector<128x128xf32>
      %cst_43 = arith.constant 1.000000e+00 : f32
      %71 = vector.broadcast %cst_43 : f32 to vector<128x128xf32>
      %72 = arith.subf %70, %71 : vector<128x128xf32>
      %73 = arith.select %67, %65, %72 : vector<128x128xi1>, vector<128x128xf32>
      %74 = arith.truncf %73 : vector<128x128xf32> to vector<128x128xbf16>
      %c0_44 = arith.constant 0 : index
      %c0_45 = arith.constant 0 : index
      %75 = vector.load %arg8[%c0_44, %c0_45] : memref<128x256xbf16, #tpu.memory_space<vmem>>, vector<128x256xbf16>
      %cst_46 = arith.constant dense<0.000000e+00> : vector<128x256xf32>
      %76 = tpu.matmul %74, %75, %cst_46 {dimension_numbers = #tpu.dot_dimension_numbers<[1], [0], [0], [1], [0, 0, 1, 1], [], []>} : vector<128x128xbf16>, vector<128x256xbf16>, vector<128x256xf32> -> vector<128x256xf32>
      %c0_47 = arith.constant 0 : index
      %c0_48 = arith.constant 0 : index
      %77 = vector.load %arg9[%c0_47, %c0_48] : memref<1x256xf32, #tpu.memory_space<vmem>>, vector<1x256xf32>
      %78 = vector.broadcast %77 : vector<1x256xf32> to vector<128x256xf32>
      %79 = arith.addf %76, %78 : vector<128x256xf32>
      %cst_49 = arith.constant 0.000000e+00 : f32
      %80 = vector.broadcast %cst_49 : f32 to vector<128x256xf32>
      %81 = arith.maximumf %79, %80 : vector<128x256xf32>
      %82 = arith.truncf %81 : vector<128x256xf32> to vector<128x256xbf16>
      %c0_50 = arith.constant 0 : index
      %c0_51 = arith.constant 0 : index
      %83 = vector.load %arg10[%c0_50, %c0_51] : memref<256x128xbf16, #tpu.memory_space<vmem>>, vector<256x128xbf16>
      %cst_52 = arith.constant dense<0.000000e+00> : vector<128x128xf32>
      %84 = tpu.matmul %82, %83, %cst_52 {dimension_numbers = #tpu.dot_dimension_numbers<[1], [0], [0], [1], [0, 0, 1, 1], [], []>} : vector<128x256xbf16>, vector<256x128xbf16>, vector<128x128xf32> -> vector<128x128xf32>
      %85 = arith.addf %73, %84 : vector<128x128xf32>
      %c0_53 = arith.constant 0 : index
      %c0_54 = arith.constant 0 : index
      %86 = vector.load %arg11[%c0_53, %c0_54] : memref<1x128xf32, #tpu.memory_space<vmem>>, vector<1x128xf32>
      %87 = vector.broadcast %86 : vector<1x128xf32> to vector<128x128xf32>
      %88 = arith.addf %85, %87 : vector<128x128xf32>
      %c0_55 = arith.constant 0 : index
      %c0_56 = arith.constant 0 : index
      %89 = vector.load %arg12[%c0_55, %c0_56] : memref<128x128xf32, #tpu.memory_space<vmem>>, vector<128x128xf32>
      tpu.vector_store %arg12[%c0_55, %c0_56], %88 {strides = array<i32>} : memref<128x128xf32, #tpu.memory_space<vmem>>, vector<128x128xf32>,
    } else {
    }
    return
  }
  func.func @transform_0(%arg0: i32, %arg1: i32) -> (i32, i32) {
    %c0_i32 = arith.constant 0 : i32
    %c0_i32_0 = arith.constant 0 : i32
    return %arg1, %c0_i32 : i32, i32
  }
  func.func @transform_1(%arg0: i32, %arg1: i32) -> (i32, i32) {
    %c0_i32 = arith.constant 0 : i32
    %c0_i32_0 = arith.constant 0 : i32
    return %arg0, %c0_i32 : i32, i32
  }
  func.func @transform_2(%arg0: i32, %arg1: i32) -> (i32, i32) {
    %c0_i32 = arith.constant 0 : i32
    return %arg0, %arg1 : i32, i32
  }
  func.func @transform_3(%arg0: i32, %arg1: i32) -> (i32, i32) {
    %c0_i32 = arith.constant 0 : i32
    %c0_i32_0 = arith.constant 0 : i32
    %c0_i32_1 = arith.constant 0 : i32
    return %c0_i32, %c0_i32_0 : i32, i32
  }
  func.func @transform_4(%arg0: i32, %arg1: i32) -> (i32, i32) {
    %c0_i32 = arith.constant 0 : i32
    %c0_i32_0 = arith.constant 0 : i32
    %c0_i32_1 = arith.constant 0 : i32
    return %c0_i32, %c0_i32_0 : i32, i32
  }
  func.func @transform_5(%arg0: i32, %arg1: i32) -> (i32, i32) {
    %c0_i32 = arith.constant 0 : i32
    %c0_i32_0 = arith.constant 0 : i32
    %c0_i32_1 = arith.constant 0 : i32
    return %c0_i32, %c0_i32_0 : i32, i32
  }
  func.func @transform_6(%arg0: i32, %arg1: i32) -> (i32, i32) {
    %c0_i32 = arith.constant 0 : i32
    %c0_i32_0 = arith.constant 0 : i32
    %c0_i32_1 = arith.constant 0 : i32
    return %c0_i32, %c0_i32_0 : i32, i32
  }
  func.func @transform_7(%arg0: i32, %arg1: i32) -> (i32, i32) {
    %c0_i32 = arith.constant 0 : i32
    %c0_i32_0 = arith.constant 0 : i32
    %c0_i32_1 = arith.constant 0 : i32
    return %c0_i32, %c0_i32_0 : i32, i32
  }
  func.func @transform_8(%arg0: i32, %arg1: i32) -> (i32, i32) {
    %c0_i32 = arith.constant 0 : i32
    %c0_i32_0 = arith.constant 0 : i32
    %c0_i32_1 = arith.constant 0 : i32
    return %c0_i32, %c0_i32_0 : i32, i32
  }
  func.func @transform_9(%arg0: i32, %arg1: i32) -> (i32, i32) {
    %c0_i32 = arith.constant 0 : i32
    %c0_i32_0 = arith.constant 0 : i32
    %c0_i32_1 = arith.constant 0 : i32
    return %c0_i32, %c0_i32_0 : i32, i32
  }
  func.func @transform_10(%arg0: i32, %arg1: i32) -> (i32, i32) {
    %c0_i32 = arith.constant 0 : i32
    %c0_i32_0 = arith.constant 0 : i32
    return %arg0, %c0_i32 : i32, i32
  }
}

</mosaic_0001>

<llo_original>
// kernel: tpu_custom_call.1
$region0: #{tpu_custom_call.1}
  #allocation0 [shape = 'u32[]', space=smem, size = 0x4, offset = 0x4, fixed_abs, tag = 'smem constant byte address 0x4 - core index']
  #allocation1 [shape = 'u32[72,128]{1,0:T(1,128)}', space=vmem, size = 0x9000, scoped, tag = 'internal scratch']
  #allocation2 [shape = 'f32[128,1]{1,0:T(8,128)}', space=vmem, size = 0x10000, scoped, tag = 'scratch operand']
  #allocation3 [shape = 'f32[128,1]{1,0:T(8,128)}', space=vmem, size = 0x10000, scoped, tag = 'scratch operand']
  #allocation4 [shape = 'f32[128,128]{1,0:T(8,128)}', space=vmem, size = 0x10000, scoped, tag = 'scratch operand']
  %s0 = inlined_call_operand.hbm [shape: f32[128,128], index: 0, kind: input, shape index: {}]
  %s1 = inlined_call_operand.hbm [shape: f32[128,128], index: 1, kind: input, shape index: {}]
  %s2 = inlined_call_operand.hbm [shape: bf16[128,128], index: 2, kind: input, shape index: {}]
  %s3 = inlined_call_operand.hbm [shape: bf16[128,128], index: 3, kind: input, shape index: {}]
  %s4 = inlined_call_operand.vmem [shape: f32[1,128], index: 4, kind: input, shape index: {}]
  %s5 = inlined_call_operand.vmem [shape: f32[1,128], index: 5, kind: input, shape index: {}]
  %s6 = inlined_call_operand.hbm [shape: bf16[128,256], index: 6, kind: input, shape index: {}]
  %s7 = inlined_call_operand.vmem [shape: f32[1,256], index: 7, kind: input, shape index: {}]
  %s8 = inlined_call_operand.hbm [shape: bf16[256,128], index: 8, kind: input, shape index: {}]
  %s9 = inlined_call_operand.vmem [shape: f32[1,128], index: 9, kind: input, shape index: {}]
  %s10 = inlined_call_operand.hbm [shape: f32[128,128], index: 10, kind: output, shape index: {}]
  %s11 = sld [smem:[#allocation0]]
  $region82: #{tpu_custom_call.1} parent=0
    _
  %s13 = ssub.s32 1, %s11
  %s14 = scalar_select 0, %s13, %s11
  $region1: #{tpu_custom_call.1} parent=0
    #allocation5 [shape = 'u8[65536]{0}', space=vmem, size = 0x10000, scoped, tag = 'input window, operand 0, single buffered']
    #allocation6 [shape = 's32[1]{0}', space=sflag, size = 0x4, scoped, tag = 'scoped memory for tpu_custom_call.1']
    #allocation7 [shape = 's32[1]{0}', space=sflag, size = 0x4, scoped, tag = 'scoped memory for tpu_custom_call.1']
    #allocation8 [shape = 'u8[65536]{0}', space=vmem, size = 0x10000, scoped, tag = 'input window, operand 1, single buffered']
    #allocation9 [shape = 's32[1]{0}', space=sflag, size = 0x4, scoped, tag = 'scoped memory for tpu_custom_call.1']
    #allocation10 [shape = 'u8[32768]{0}', space=vmem, size = 0x8000, scoped, tag = 'input window, operand 2, single buffered']
    #allocation11 [shape = 'u8[32768]{0}', space=vmem, size = 0x8000, scoped, tag = 'input window, operand 3, single buffered']
    #allocation12 [shape = 's32[1]{0}', space=sflag, size = 0x4, scoped, tag = 'scoped memory for tpu_custom_call.1']
    #allocation13 [shape = 'u8[65536]{0}', space=vmem, size = 0x10000, scoped, tag = 'input window, operand 6, single buffered']
    #allocation14 [shape = 'u8[65536]{0}', space=vmem, size = 0x10000, scoped, tag = 'input window, operand 8, single buffered']
    #allocation15 [shape = 's32[1]{0}', space=sflag, size = 0x4, scoped, tag = 'scoped memory for tpu_custom_call.1']
    #allocation16 [shape = 'u8[65536]{0}', space=vmem, size = 0x10000, scoped, tag = 'output window, operand 0, single buffered']
    %15 = vsyncpa [#allocation6], 0
    %16 = vsyncpa [#allocation9], 0
    %17 = vsyncpa [#allocation12], 0
    %18 = vsyncpa [#allocation15], 0
    %19 = vsyncpa [#allocation7], 0
    // Predicated region
    $region2: #{tpu_custom_call.1} parent=1 // pred_check
      _
    $region3: #{tpu_custom_call.1} parent=1 // pred_check_branch
      %21 = sbr.rel (0) target = $region5
    $region4: #{tpu_custom_call.1} parent=1 // pred_region
      %23 = vsyncadd [#allocation6], 0
      %s24 = sshll.u32 %s0, 4
      %s25 = int_to_ptr.hbm [resolvable:$true] %s24
      %s26 = sshll.u32 [#allocation5], 4
      %s27 = int_to_ptr.vmem [resolvable:$true] %s26
      %32 = dma.hbm_to_vmem [thread:$0]  %s25, 2048, %s27, [#allocation6], 128, 128, 8
    $region5: #{tpu_custom_call.1} parent=1 // pred_fallthru
      _
    // Predicated region
    $region6: #{tpu_custom_call.1} parent=1 // pred_check
      _
    $region7: #{tpu_custom_call.1} parent=1 // pred_check_branch
      %34 = sbr.rel (0) target = $region9
    $region8: #{tpu_custom_call.1} parent=1 // pred_region
      %36 = vsyncadd [#allocation9], 0
      %s37 = sshll.u32 %s1, 4
      %s38 = int_to_ptr.hbm [resolvable:$true] %s37
      %s39 = sshll.u32 [#allocation8], 4
      %s40 = int_to_ptr.vmem [resolvable:$true] %s39
      %45 = dma.hbm_to_vmem [thread:$0]  %s38, 2048, %s40, [#allocation9], 128, 128, 8
    $region9: #{tpu_custom_call.1} parent=1 // pred_fallthru
      _
    // Predicated region
    $region10: #{tpu_custom_call.1} parent=1 // pred_check
      _
    $region11: #{tpu_custom_call.1} parent=1 // pred_check_branch
      %47 = sbr.rel (0) target = $region13
    $region12: #{tpu_custom_call.1} parent=1 // pred_region
      %49 = vsyncadd [#allocation9], 0
      %s50 = sshll.u32 %s2, 4
      %s51 = int_to_ptr.hbm [resolvable:$true] %s50
      %s52 = sshll.u32 [#allocation10], 4
      %s53 = int_to_ptr.vmem [resolvable:$true] %s52
      %58 = dma.hbm_to_vmem [thread:$0]  %s51, 1024, %s53, [#allocation9], 64, 64, 4
    $region13: #{tpu_custom_call.1} parent=1 // pred_fallthru
      _
    // Predicated region
    $region14: #{tpu_custom_call.1} parent=1 // pred_check
      _
    $region15: #{tpu_custom_call.1} parent=1 // pred_check_branch
      %60 = sbr.rel (0) target = $region17
    $region16: #{tpu_custom_call.1} parent=1 // pred_region
      %62 = vsyncadd [#allocation12], 0
      %s63 = sshll.u32 %s3, 4
      %s64 = int_to_ptr.hbm [resolvable:$true] %s63
      %s65 = sshll.u32 [#allocation11], 4
      %s66 = int_to_ptr.vmem [resolvable:$true] %s65
      %71 = dma.hbm_to_vmem [thread:$0]  %s64, 1024, %s66, [#allocation12], 64, 64, 4
    $region17: #{tpu_custom_call.1} parent=1 // pred_fallthru
      _
    // Predicated region
    $region18: #{tpu_custom_call.1} parent=1 // pred_check
      _
    $region19: #{tpu_custom_call.1} parent=1 // pred_check_branch
      %73 = sbr.rel (0) target = $region21
    $region20: #{tpu_custom_call.1} parent=1 // pred_region
      _
    $region21: #{tpu_custom_call.1} parent=1 // pred_fallthru
      _
    // Predicated region
    $region22: #{tpu_custom_call.1} parent=1 // pred_check
      _
    $region23: #{tpu_custom_call.1} parent=1 // pred_check_branch
      %75 = sbr.rel (0) target = $region25
    $region24: #{tpu_custom_call.1} parent=1 // pred_region
      _
    $region25: #{tpu_custom_call.1} parent=1 // pred_fallthru
      _
    // Predicated region
    $region26: #{tpu_custom_call.1} parent=1 // pred_check
      _
    $region27: #{tpu_custom_call.1} parent=1 // pred_check_branch
      %77 = sbr.rel (0) target = $region29
    $region28: #{tpu_custom_call.1} parent=1 // pred_region
      %79 = vsyncadd [#allocation12], 0
      %s80 = sshll.u32 %s6, 4
      %s81 = int_to_ptr.hbm [resolvable:$true] %s80
      %s82 = sshll.u32 [#allocation13], 4
      %s83 = int_to_ptr.vmem [resolvable:$true] %s82
      %88 = dma.hbm_to_vmem [thread:$0]  %s81, 2048, %s83, [#allocation12], 128, 128, 8
    $region29: #{tpu_custom_call.1} parent=1 // pred_fallthru
      _
    // Predicated region
    $region30: #{tpu_custom_call.1} parent=1 // pred_check
      _
    $region31: #{tpu_custom_call.1} parent=1 // pred_check_branch
      %90 = sbr.rel (0) target = $region33
    $region32: #{tpu_custom_call.1} parent=1 // pred_region
      _
    $region33: #{tpu_custom_call.1} parent=1 // pred_fallthru
      _
    // Predicated region
    $region34: #{tpu_custom_call.1} parent=1 // pred_check
      _
    $region35: #{tpu_custom_call.1} parent=1 // pred_check_branch
      %92 = sbr.rel (0) target = $region37
    $region36: #{tpu_custom_call.1} parent=1 // pred_region
      %94 = vsyncadd [#allocation15], 0
      %s95 = sshll.u32 %s8, 4
      %s96 = int_to_ptr.hbm [resolvable:$true] %s95
      %s97 = sshll.u32 [#allocation14], 4
      %s98 = int_to_ptr.vmem [resolvable:$true] %s97
      %103 = dma.hbm_to_vmem [thread:$0]  %s96, 2048, %s98, [#allocation15], 64, 64, 4
    $region37: #{tpu_custom_call.1} parent=1 // pred_fallthru
      _
    // Predicated region
    $region38: #{tpu_custom_call.1} parent=1 // pred_check
      _
    $region39: #{tpu_custom_call.1} parent=1 // pred_check_branch
      %105 = sbr.rel (0) target = $region41
    $region40: #{tpu_custom_call.1} parent=1 // pred_region
      _
    $region41: #{tpu_custom_call.1} parent=1 // pred_fallthru
      _
    // Predicated region
    $region42: #{tpu_custom_call.1} parent=1 // pred_check
      _
    $region43: #{tpu_custom_call.1} parent=1 // pred_check_branch
      %107 = sbr.rel (0) target = $region45
    $region44: #{tpu_custom_call.1} parent=1 // pred_region
      %109 = dma.done [#allocation6], 2048
    $region45: #{tpu_custom_call.1} parent=1 // pred_fallthru
      _
    // Predicated region
    $region46: #{tpu_custom_call.1} parent=1 // pred_check
      _
    $region47: #{tpu_custom_call.1} parent=1 // pred_check_branch
      %111 = sbr.rel (0) target = $region49
    $region48: #{tpu_custom_call.1} parent=1 // pred_region
      %113 = dma.done [#allocation9], 2048
    $region49: #{tpu_custom_call.1} parent=1 // pred_fallthru
      _
    // Predicated region
    $region50: #{tpu_custom_call.1} parent=1 // pred_check
      _
    $region51: #{tpu_custom_call.1} parent=1 // pred_check_branch
      %115 = sbr.rel (0) target = $region53
    $region52: #{tpu_custom_call.1} parent=1 // pred_region
      %117 = dma.done [#allocation9], 1024
    $region53: #{tpu_custom_call.1} parent=1 // pred_fallthru
      _
    // Predicated region
    $region54: #{tpu_custom_call.1} parent=1 // pred_check
      _
    $region55: #{tpu_custom_call.1} parent=1 // pred_check_branch
      %119 = sbr.rel (0) target = $region57
    $region56: #{tpu_custom_call.1} parent=1 // pred_region
      %121 = dma.done [#allocation12], 1024
    $region57: #{tpu_custom_call.1} parent=1 // pred_fallthru
      _
    // Predicated region
    $region58: #{tpu_custom_call.1} parent=1 // pred_check
      _
    $region59: #{tpu_custom_call.1} parent=1 // pred_check_branch
      %123 = sbr.rel (0) target = $region61
    $region60: #{tpu_custom_call.1} parent=1 // pred_region
      %125 = dma.done [#allocation12], 2048
    $region61: #{tpu_custom_call.1} parent=1 // pred_fallthru
      _
    // Predicated region
    $region62: #{tpu_custom_call.1} parent=1 // pred_check
      _
    $region63: #{tpu_custom_call.1} parent=1 // pred_check_branch
      %127 = sbr.rel (0) target = $region65
    $region64: #{tpu_custom_call.1} parent=1 // pred_region
      %129 = dma.done [#allocation15], 2048
    $region65: #{tpu_custom_call.1} parent=1 // pred_fallthru
      _
    %p130 = scmp.eq.s32.totalorder 0, 0
    // Predicated region
    $region66: #{tpu_custom_call.1} parent=1 // pred_check
      %p131 = pneg %p130
    $region67: #{tpu_custom_call.1} parent=1 // pred_check_branch
      %133 = sbr.rel (%p131) target = $region69
    $region68: #{tpu_custom_call.1} parent=1 // pred_region
      %vm134 = vcmask 7168
      %135 = vst.msk [vmem:[#allocation2] sm:$0xff] %vm134, -1e+30
      %136 = vst.msk [vmem:[#allocation2 + $0x8] sm:$0xff] %vm134, -1e+30
      %137 = vst.msk [vmem:[#allocation2 + $0x10] sm:$0xff] %vm134, -1e+30
      %138 = vst.msk [vmem:[#allocation2 + $0x18] sm:$0xff] %vm134, -1e+30
      %139 = vst.msk [vmem:[#allocation2 + $0x20] sm:$0xff] %vm134, -1e+30
      %140 = vst.msk [vmem:[#allocation2 + $0x28] sm:$0xff] %vm134, -1e+30
      %141 = vst.msk [vmem:[#allocation2 + $0x30] sm:$0xff] %vm134, -1e+30
      %142 = vst.msk [vmem:[#allocation2 + $0x38] sm:$0xff] %vm134, -1e+30
      %143 = vst.msk [vmem:[#allocation2 + $0x40] sm:$0xff] %vm134, -1e+30
      %144 = vst.msk [vmem:[#allocation2 + $0x48] sm:$0xff] %vm134, -1e+30
      %145 = vst.msk [vmem:[#allocation2 + $0x50] sm:$0xff] %vm134, -1e+30
      %146 = vst.msk [vmem:[#allocation2 + $0x58] sm:$0xff] %vm134, -1e+30
      %147 = vst.msk [vmem:[#allocation2 + $0x60] sm:$0xff] %vm134, -1e+30
      %148 = vst.msk [vmem:[#allocation2 + $0x68] sm:$0xff] %vm134, -1e+30
      %149 = vst.msk [vmem:[#allocation2 + $0x70] sm:$0xff] %vm134, -1e+30
      %150 = vst.msk [vmem:[#allocation2 + $0x78] sm:$0xff] %vm134, -1e+30
      %151 = vst.msk [vmem:[#allocation3] sm:$0xff] %vm134, 0.0
      %152 = vst.msk [vmem:[#allocation3 + $0x8] sm:$0xff] %vm134, 0.0
      %153 = vst.msk [vmem:[#allocation3 + $0x10] sm:$0xff] %vm134, 0.0
      %154 = vst.msk [vmem:[#allocation3 + $0x18] sm:$0xff] %vm134, 0.0
      %155 = vst.msk [vmem:[#allocation3 + $0x20] sm:$0xff] %vm134, 0.0
      %156 = vst.msk [vmem:[#allocation3 + $0x28] sm:$0xff] %vm134, 0.0
      %157 = vst.msk [vmem:[#allocation3 + $0x30] sm:$0xff] %vm134, 0.0
      %158 = vst.msk [vmem:[#allocation3 + $0x38] sm:$0xff] %vm134, 0.0
      %159 = vst.msk [vmem:[#allocation3 + $0x40] sm:$0xff] %vm134, 0.0
      %160 = vst.msk [vmem:[#allocation3 + $0x48] sm:$0xff] %vm134, 0.0
      %161 = vst.msk [vmem:[#allocation3 + $0x50] sm:$0xff] %vm134, 0.0
      %162 = vst.msk [vmem:[#allocation3 + $0x58] sm:$0xff] %vm134, 0.0
      %163 = vst.msk [vmem:[#allocation3 + $0x60] sm:$0xff] %vm134, 0.0
      %164 = vst.msk [vmem:[#allocation3 + $0x68] sm:$0xff] %vm134, 0.0
      %165 = vst.msk [vmem:[#allocation3 + $0x70] sm:$0xff] %vm134, 0.0
      %166 = vst.msk [vmem:[#allocation3 + $0x78] sm:$0xff] %vm134, 0.0
      %167 = vst [vmem:[#allocation4] sm:$0xff] 0.0
      %168 = vst [vmem:[#allocation4 + $0x8] sm:$0xff] 0.0
      %169 = vst [vmem:[#allocation4 + $0x10] sm:$0xff] 0.0
      %170 = vst [vmem:[#allocation4 + $0x18] sm:$0xff] 0.0
      %171 = vst [vmem:[#allocation4 + $0x20] sm:$0xff] 0.0
      %172 = vst [vmem:[#allocation4 + $0x28] sm:$0xff] 0.0
      %173 = vst [vmem:[#allocation4 + $0x30] sm:$0xff] 0.0
      %174 = vst [vmem:[#allocation4 + $0x38] sm:$0xff] 0.0
      %175 = vst [vmem:[#allocation4 + $0x40] sm:$0xff] 0.0
      %176 = vst [vmem:[#allocation4 + $0x48] sm:$0xff] 0.0
      %177 = vst [vmem:[#allocation4 + $0x50] sm:$0xff] 0.0
      %178 = vst [vmem:[#allocation4 + $0x58] sm:$0xff] 0.0
      %179 = vst [vmem:[#allocation4 + $0x60] sm:$0xff] 0.0
      %180 = vst [vmem:[#allocation4 + $0x68] sm:$0xff] 0.0
      %181 = vst [vmem:[#allocation4 + $0x70] sm:$0xff] 0.0
      %182 = vst [vmem:[#allocation4 + $0x78] sm:$0xff] 0.0
    $region69: #{tpu_custom_call.1} parent=1 // pred_fallthru
      _
    %v183 = vld [vmem:[#allocation5] sm:$0xff]
    %v184 = vld [vmem:[#allocation5 + $0x8] sm:$0xff]
    %v185 = vld [vmem:[#allocation5 + $0x10] sm:$0xff]
    %v186 = vld [vmem:[#allocation5 + $0x18] sm:$0xff]
    %v187 = vld [vmem:[#allocation5 + $0x20] sm:$0xff]
    %v188 = vld [vmem:[#allocation5 + $0x28] sm:$0xff]
    %v189 = vld [vmem:[#allocation5 + $0x30] sm:$0xff]
    %v190 = vld [vmem:[#allocation5 + $0x38] sm:$0xff]
    %v191 = vld [vmem:[#allocation5 + $0x40] sm:$0xff]
    %v192 = vld [vmem:[#allocation5 + $0x48] sm:$0xff]
    %v193 = vld [vmem:[#allocation5 + $0x50] sm:$0xff]
    %v194 = vld [vmem:[#allocation5 + $0x58] sm:$0xff]
    %v195 = vld [vmem:[#allocation5 + $0x60] sm:$0xff]
    %v196 = vld [vmem:[#allocation5 + $0x68] sm:$0xff]
    %v197 = vld [vmem:[#allocation5 + $0x70] sm:$0xff]
    %v198 = vld [vmem:[#allocation5 + $0x78] sm:$0xff]
    %v199 = vld [vmem:[#allocation8] sm:$0xff]
    %v200 = vld [vmem:[#allocation8 + $0x8] sm:$0xff]
    %v201 = vld [vmem:[#allocation8 + $0x10] sm:$0xff]
    %v202 = vld [vmem:[#allocation8 + $0x18] sm:$0xff]
    %v203 = vld [vmem:[#allocation8 + $0x20] sm:$0xff]
    %v204 = vld [vmem:[#allocation8 + $0x28] sm:$0xff]
    %v205 = vld [vmem:[#allocation8 + $0x30] sm:$0xff]
    %v206 = vld [vmem:[#allocation8 + $0x38] sm:$0xff]
    %v207 = vld [vmem:[#allocation8 + $0x40] sm:$0xff]
    %v208 = vld [vmem:[#allocation8 + $0x48] sm:$0xff]
    %v209 = vld [vmem:[#allocation8 + $0x50] sm:$0xff]
    %v210 = vld [vmem:[#allocation8 + $0x58] sm:$0xff]
    %v211 = vld [vmem:[#allocation8 + $0x60] sm:$0xff]
    %v212 = vld [vmem:[#allocation8 + $0x68] sm:$0xff]
    %v213 = vld [vmem:[#allocation8 + $0x70] sm:$0xff]
    %v214 = vld [vmem:[#allocation8 + $0x78] sm:$0xff]
    %v215 = vld [vmem:[#allocation10] sm:$0xf]
    %v216 = vld [vmem:[#allocation10 + $0x4] sm:$0xf]
    %v217 = vld [vmem:[#allocation10 + $0x8] sm:$0xf]
    %v218 = vld [vmem:[#allocation10 + $0xc] sm:$0xf]
    %v219 = vld [vmem:[#allocation10 + $0x10] sm:$0xf]
    %v220 = vld [vmem:[#allocation10 + $0x14] sm:$0xf]
    %v221 = vld [vmem:[#allocation10 + $0x18] sm:$0xf]
    %v222 = vld [vmem:[#allocation10 + $0x1c] sm:$0xf]
    %v223 = vld [vmem:[#allocation10 + $0x20] sm:$0xf]
    %v224 = vld [vmem:[#allocation10 + $0x24] sm:$0xf]
    %v225 = vld [vmem:[#allocation10 + $0x28] sm:$0xf]
    %v226 = vld [vmem:[#allocation10 + $0x2c] sm:$0xf]
    %v227 = vld [vmem:[#allocation10 + $0x30] sm:$0xf]
    %v228 = vld [vmem:[#allocation10 + $0x34] sm:$0xf]
    %v229 = vld [vmem:[#allocation10 + $0x38] sm:$0xf]
    %v230 = vld [vmem:[#allocation10 + $0x3c] sm:$0xf]
    %v231 = vunpack.c.l.bf16 %v215
    %v232 = vunpack.c.l.bf16 %v216
    %v233 = vunpack.c.l.bf16 %v217
    %v234 = vunpack.c.l.bf16 %v218
    %v235 = vunpack.c.l.bf16 %v219
    %v236 = vunpack.c.l.bf16 %v220
    %v237 = vunpack.c.l.bf16 %v221
    %v238 = vunpack.c.l.bf16 %v222
    %v239 = vunpack.c.l.bf16 %v223
    %v240 = vunpack.c.l.bf16 %v224
    %v241 = vunpack.c.l.bf16 %v225
    %v242 = vunpack.c.l.bf16 %v226
    %v243 = vunpack.c.l.bf16 %v227
    %v244 = vunpack.c.l.bf16 %v228
    %v245 = vunpack.c.l.bf16 %v229
    %v246 = vunpack.c.l.bf16 %v230
    %vm247 = vcmp.gt.f32.partialorder %v231, -1e+29
    %vm248 = vcmp.gt.f32.partialorder %v232, -1e+29
    %vm249 = vcmp.gt.f32.partialorder %v233, -1e+29
    %vm250 = vcmp.gt.f32.partialorder %v234, -1e+29
    %vm251 = vcmp.gt.f32.partialorder %v235, -1e+29
    %vm252 = vcmp.gt.f32.partialorder %v236, -1e+29
    %vm253 = vcmp.gt.f32.partialorder %v237, -1e+29
    %vm254 = vcmp.gt.f32.partialorder %v238, -1e+29
    %vm255 = vcmp.gt.f32.partialorder %v239, -1e+29
    %vm256 = vcmp.gt.f32.partialorder %v240, -1e+29
    %vm257 = vcmp.gt.f32.partialorder %v241, -1e+29
    %vm258 = vcmp.gt.f32.partialorder %v242, -1e+29
    %vm259 = vcmp.gt.f32.partialorder %v243, -1e+29
    %vm260 = vcmp.gt.f32.partialorder %v244, -1e+29
    %vm261 = vcmp.gt.f32.partialorder %v245, -1e+29
    %vm262 = vcmp.gt.f32.partialorder %v246, -1e+29
    %v263 = vpack.c.bf16 %v184, %v183
    %v264 = vpack.c.bf16 %v186, %v185
    %v265 = vpack.c.bf16 %v188, %v187
    %v266 = vpack.c.bf16 %v190, %v189
    %v267 = vpack.c.bf16 %v192, %v191
    %v268 = vpack.c.bf16 %v194, %v193
    %v269 = vpack.c.bf16 %v196, %v195
    %v270 = vpack.c.bf16 %v198, %v197
    %v271 = vld [vmem:[#allocation11] sm:$0xf]
    %v272 = vld [vmem:[#allocation11 + $0x4] sm:$0xf]
    %v273 = vld [vmem:[#allocation11 + $0x8] sm:$0xf]
    %v274 = vld [vmem:[#allocation11 + $0xc] sm:$0xf]
    %v275 = vld [vmem:[#allocation11 + $0x10] sm:$0xf]
    %v276 = vld [vmem:[#allocation11 + $0x14] sm:$0xf]
    %v277 = vld [vmem:[#allocation11 + $0x18] sm:$0xf]
    %v278 = vld [vmem:[#allocation11 + $0x1c] sm:$0xf]
    %v279 = vld [vmem:[#allocation11 + $0x20] sm:$0xf]
    %v280 = vld [vmem:[#allocation11 + $0x24] sm:$0xf]
    %v281 = vld [vmem:[#allocation11 + $0x28] sm:$0xf]
    %v282 = vld [vmem:[#allocation11 + $0x2c] sm:$0xf]
    %v283 = vld [vmem:[#allocation11 + $0x30] sm:$0xf]
    %v284 = vld [vmem:[#allocation11 + $0x34] sm:$0xf]
    %v285 = vld [vmem:[#allocation11 + $0x38] sm:$0xf]
    %v286 = vld [vmem:[#allocation11 + $0x3c] sm:$0xf]
    %v303 = vunpack.c.l.b16 %v271
    %v304 = vunpack.c.l.b16 %v272
    %v305 = vunpack.c.l.b16 %v273
    %v306 = vunpack.c.l.b16 %v274
    %v307 = vunpack.c.l.b16 %v275
    %v308 = vunpack.c.l.b16 %v276
    %v309 = vunpack.c.l.b16 %v277
    %v310 = vunpack.c.l.b16 %v278
    %v311 = vunpack.c.l.b16 %v279
    %v312 = vunpack.c.l.b16 %v280
    %v313 = vunpack.c.l.b16 %v281
    %v314 = vunpack.c.l.b16 %v282
    %v315 = vunpack.c.l.b16 %v283
    %v316 = vunpack.c.l.b16 %v284
    %v317 = vunpack.c.l.b16 %v285
    %v318 = vunpack.c.l.b16 %v286
    %v319 = vpack.c.b16 %v304, %v303
    %v320 = vpack.c.b16 %v306, %v305
    %v321 = vpack.c.b16 %v308, %v307
    %v322 = vpack.c.b16 %v310, %v309
    %v323 = vpack.c.b16 %v312, %v311
    %v324 = vpack.c.b16 %v314, %v313
    %v325 = vpack.c.b16 %v316, %v315
    %v326 = vpack.c.b16 %v318, %v317
    %335 = vmatpush.bf16.msra.mxu0 %v326
    %336 = vmatpush.bf16.msra.mxu0 %v325
    %337 = vmatpush.bf16.msra.mxu0 %v324
    %338 = vmatpush.bf16.msra.mxu0 %v323
    %339 = vmatpush.bf16.msra.mxu0 %v322
    %340 = vmatpush.bf16.msra.mxu0 %v321
    %341 = vmatpush.bf16.msra.mxu0 %v320
    %342 = vmatpush.bf16.msra.mxu0 %v319
    %343 = vmatmul.bf16.gmra.mxu0 %v263
    %v344 = vpop.f32.mrf.mxu0
    %v345 = vadd.f32 0.0, %v344
    %v346 = vpop.f32.mrf.mxu0
    %v347 = vadd.f32 0.0, %v346
    %348 = vmatmul.bf16.gmra.mxu0 %v264
    %v349 = vpop.f32.mrf.mxu0
    %v350 = vadd.f32 0.0, %v349
    %v351 = vpop.f32.mrf.mxu0
    %v352 = vadd.f32 0.0, %v351
    %353 = vmatmul.bf16.gmra.mxu0 %v265
    %v354 = vpop.f32.mrf.mxu0
    %v355 = vadd.f32 0.0, %v354
    %v356 = vpop.f32.mrf.mxu0
    %v357 = vadd.f32 0.0, %v356
    %358 = vmatmul.bf16.gmra.mxu0 %v266
    %v359 = vpop.f32.mrf.mxu0
    %v360 = vadd.f32 0.0, %v359
    %v361 = vpop.f32.mrf.mxu0
    %v362 = vadd.f32 0.0, %v361
    %363 = vmatmul.bf16.gmra.mxu0 %v267
    %v364 = vpop.f32.mrf.mxu0
    %v365 = vadd.f32 0.0, %v364
    %v366 = vpop.f32.mrf.mxu0
    %v367 = vadd.f32 0.0, %v366
    %368 = vmatmul.bf16.gmra.mxu0 %v268
    %v369 = vpop.f32.mrf.mxu0
    %v370 = vadd.f32 0.0, %v369
    %v371 = vpop.f32.mrf.mxu0
    %v372 = vadd.f32 0.0, %v371
    %373 = vmatmul.bf16.gmra.mxu0 %v269
    %v374 = vpop.f32.mrf.mxu0
    %v375 = vadd.f32 0.0, %v374
    %v376 = vpop.f32.mrf.mxu0
    %v377 = vadd.f32 0.0, %v376
    %378 = vmatmul.bf16.gmra.mxu0 %v270
    %v379 = vpop.f32.mrf.mxu0
    %v380 = vadd.f32 0.0, %v379
    %v381 = vpop.f32.mrf.mxu0
    %v382 = vadd.f32 0.0, %v381
    %383 = vdwg.mxu0
    %v384 = vld [vmem:[%s5] sm:$0x1]
    %v386 = vperm.slane %v384, 0
    %v388 = vmul.f32 %v199, %v386
    %v389 = vmul.f32 %v200, %v386
    %v390 = vmul.f32 %v201, %v386
    %v391 = vmul.f32 %v202, %v386
    %v392 = vmul.f32 %v203, %v386
    %v393 = vmul.f32 %v204, %v386
    %v394 = vmul.f32 %v205, %v386
    %v395 = vmul.f32 %v206, %v386
    %v396 = vmul.f32 %v207, %v386
    %v397 = vmul.f32 %v208, %v386
    %v398 = vmul.f32 %v209, %v386
    %v399 = vmul.f32 %v210, %v386
    %v400 = vmul.f32 %v211, %v386
    %v401 = vmul.f32 %v212, %v386
    %v402 = vmul.f32 %v213, %v386
    %v403 = vmul.f32 %v214, %v386
    %404 = vadd.xlane.f32.xlu0 %v388
    %v405 = vpop.xlane.xlu0 %404
    %406 = vadd.xlane.f32.xlu0 %v389
    %v407 = vpop.xlane.xlu0 %406
    %408 = vadd.xlane.f32.xlu0 %v390
    %v409 = vpop.xlane.xlu0 %408
    %410 = vadd.xlane.f32.xlu0 %v391
    %v411 = vpop.xlane.xlu0 %410
    %412 = vadd.xlane.f32.xlu0 %v392
    %v413 = vpop.xlane.xlu0 %412
    %414 = vadd.xlane.f32.xlu0 %v393
    %v415 = vpop.xlane.xlu0 %414
    %416 = vadd.xlane.f32.xlu0 %v394
    %v417 = vpop.xlane.xlu0 %416
    %418 = vadd.xlane.f32.xlu0 %v395
    %v419 = vpop.xlane.xlu0 %418
    %420 = vadd.xlane.f32.xlu0 %v396
    %v421 = vpop.xlane.xlu0 %420
    %422 = vadd.xlane.f32.xlu0 %v397
    %v423 = vpop.xlane.xlu0 %422
    %424 = vadd.xlane.f32.xlu0 %v398
    %v425 = vpop.xlane.xlu0 %424
    %426 = vadd.xlane.f32.xlu0 %v399
    %v427 = vpop.xlane.xlu0 %426
    %428 = vadd.xlane.f32.xlu0 %v400
    %v429 = vpop.xlane.xlu0 %428
    %430 = vadd.xlane.f32.xlu0 %v401
    %v431 = vpop.xlane.xlu0 %430
    %432 = vadd.xlane.f32.xlu0 %v402
    %v433 = vpop.xlane.xlu0 %432
    %434 = vadd.xlane.f32.xlu0 %v403
    %v435 = vpop.xlane.xlu0 %434
    %v436 = vld [vmem:[%s4] sm:$0x1]
    %437 = vmatpush.xpose.msra.mxu0 %v198
    %438 = vmatpush.xpose.msra.mxu0 %v197
    %439 = vmatpush.xpose.msra.mxu0 %v196
    %440 = vmatpush.xpose.msra.mxu0 %v195
    %441 = vmatpush.xpose.msra.mxu0 %v194
    %442 = vmatpush.xpose.msra.mxu0 %v193
    %443 = vmatpush.xpose.msra.mxu0 %v192
    %444 = vmatpush.xpose.msra.mxu0 %v191
    %445 = vmatpush.xpose.msra.mxu0 %v190
    %446 = vmatpush.xpose.msra.mxu0 %v189
    %447 = vmatpush.xpose.msra.mxu0 %v188
    %448 = vmatpush.xpose.msra.mxu0 %v187
    %449 = vmatpush.xpose.msra.mxu0 %v186
    %450 = vmatpush.xpose.msra.mxu0 %v185
    %451 = vmatpush.xpose.msra.mxu0 %v184
    %452 = vmatpush.xpose.msra.mxu0 %v183
    %453 = vmatmul.f32.gmra.mxu0 %v436
    %v454 = vpop.f32.mrf.mxu0
    %v455 = vadd.f32 0.0, %v454
    %456 = vdwg.mxu0
    %v457 = vperm.slane %v455, 0
    %v458 = vadd.f32 %v405, %v457
    %v459 = vadd.f32 %v407, %v457
    %v460 = vadd.f32 %v409, %v457
    %v461 = vadd.f32 %v411, %v457
    %v462 = vadd.f32 %v413, %v457
    %v463 = vadd.f32 %v415, %v457
    %v464 = vadd.f32 %v417, %v457
    %v465 = vadd.f32 %v419, %v457
    %v466 = vadd.f32 %v421, %v457
    %v467 = vadd.f32 %v423, %v457
    %v468 = vadd.f32 %v425, %v457
    %v469 = vadd.f32 %v427, %v457
    %v470 = vadd.f32 %v429, %v457
    %v471 = vadd.f32 %v431, %v457
    %v472 = vadd.f32 %v433, %v457
    %v473 = vadd.f32 %v435, %v457
    %v474 = vadd.f32 %v458, %v231
    %v475 = vadd.f32 %v459, %v232
    %v476 = vadd.f32 %v460, %v233
    %v477 = vadd.f32 %v461, %v234
    %v478 = vadd.f32 %v462, %v235
    %v479 = vadd.f32 %v463, %v236
    %v480 = vadd.f32 %v464, %v237
    %v481 = vadd.f32 %v465, %v238
    %v482 = vadd.f32 %v466, %v239
    %v483 = vadd.f32 %v467, %v240
    %v484 = vadd.f32 %v468, %v241
    %v485 = vadd.f32 %v469, %v242
    %v486 = vadd.f32 %v470, %v243
    %v487 = vadd.f32 %v471, %v244
    %v488 = vadd.f32 %v472, %v245
    %v489 = vadd.f32 %v473, %v246
    %vm490 = vcmp.gt.f32.partialorder %v474, 0.0
    %vm491 = vcmp.gt.f32.partialorder %v475, 0.0
    %vm492 = vcmp.gt.f32.partialorder %v476, 0.0
    %vm493 = vcmp.gt.f32.partialorder %v477, 0.0
    %vm494 = vcmp.gt.f32.partialorder %v478, 0.0
    %vm495 = vcmp.gt.f32.partialorder %v479, 0.0
    %vm496 = vcmp.gt.f32.partialorder %v480, 0.0
    %vm497 = vcmp.gt.f32.partialorder %v481, 0.0
    %vm498 = vcmp.gt.f32.partialorder %v482, 0.0
    %vm499 = vcmp.gt.f32.partialorder %v483, 0.0
    %vm500 = vcmp.gt.f32.partialorder %v484, 0.0
    %vm501 = vcmp.gt.f32.partialorder %v485, 0.0
    %vm502 = vcmp.gt.f32.partialorder %v486, 0.0
    %vm503 = vcmp.gt.f32.partialorder %v487, 0.0
    %vm504 = vcmp.gt.f32.partialorder %v488, 0.0
    %vm505 = vcmp.gt.f32.partialorder %v489, 0.0
    %v506 = vmul.f32 %v474, 0.2
    %v507 = vmul.f32 %v475, 0.2
    %v508 = vmul.f32 %v476, 0.2
    %v509 = vmul.f32 %v477, 0.2
    %v510 = vmul.f32 %v478, 0.2
    %v511 = vmul.f32 %v479, 0.2
    %v512 = vmul.f32 %v480, 0.2
    %v513 = vmul.f32 %v481, 0.2
    %v514 = vmul.f32 %v482, 0.2
    %v515 = vmul.f32 %v483, 0.2
    %v516 = vmul.f32 %v484, 0.2
    %v517 = vmul.f32 %v485, 0.2
    %v518 = vmul.f32 %v486, 0.2
    %v519 = vmul.f32 %v487, 0.2
    %v520 = vmul.f32 %v488, 0.2
    %v521 = vmul.f32 %v489, 0.2
    %v522 = vsel %vm490, %v474, %v506
    %v523 = vsel %vm491, %v475, %v507
    %v524 = vsel %vm492, %v476, %v508
    %v525 = vsel %vm493, %v477, %v509
    %v526 = vsel %vm494, %v478, %v510
    %v527 = vsel %vm495, %v479, %v511
    %v528 = vsel %vm496, %v480, %v512
    %v529 = vsel %vm497, %v481, %v513
    %v530 = vsel %vm498, %v482, %v514
    %v531 = vsel %vm499, %v483, %v515
    %v532 = vsel %vm500, %v484, %v516
    %v533 = vsel %vm501, %v485, %v517
    %v534 = vsel %vm502, %v486, %v518
    %v535 = vsel %vm503, %v487, %v519
    %v536 = vsel %vm504, %v488, %v520
    %v537 = vsel %vm505, %v489, %v521
    %v538 = vsel %vm247, %v522, -1e+30
    %v539 = vsel %vm248, %v523, -1e+30
    %v540 = vsel %vm249, %v524, -1e+30
    %v541 = vsel %vm250, %v525, -1e+30
    %v542 = vsel %vm251, %v526, -1e+30
    %v543 = vsel %vm252, %v527, -1e+30
    %v544 = vsel %vm253, %v528, -1e+30
    %v545 = vsel %vm254, %v529, -1e+30
    %v546 = vsel %vm255, %v530, -1e+30
    %v547 = vsel %vm256, %v531, -1e+30
    %v548 = vsel %vm257, %v532, -1e+30
    %v549 = vsel %vm258, %v533, -1e+30
    %v550 = vsel %vm259, %v534, -1e+30
    %v551 = vsel %vm260, %v535, -1e+30
    %v552 = vsel %vm261, %v536, -1e+30
    %v553 = vsel %vm262, %v537, -1e+30
    %v554 = vld [vmem:[#allocation2] sm:$0xff]
    %v555 = vld [vmem:[#allocation2 + $0x8] sm:$0xff]
    %v556 = vld [vmem:[#allocation2 + $0x10] sm:$0xff]
    %v557 = vld [vmem:[#allocation2 + $0x18] sm:$0xff]
    %v558 = vld [vmem:[#allocation2 + $0x20] sm:$0xff]
    %v559 = vld [vmem:[#allocation2 + $0x28] sm:$0xff]
    %v560 = vld [vmem:[#allocation2 + $0x30] sm:$0xff]
    %v561 = vld [vmem:[#allocation2 + $0x38] sm:$0xff]
    %v562 = vld [vmem:[#allocation2 + $0x40] sm:$0xff]
    %v563 = vld [vmem:[#allocation2 + $0x48] sm:$0xff]
    %v564 = vld [vmem:[#allocation2 + $0x50] sm:$0xff]
    %v565 = vld [vmem:[#allocation2 + $0x58] sm:$0xff]
    %v566 = vld [vmem:[#allocation2 + $0x60] sm:$0xff]
    %v567 = vld [vmem:[#allocation2 + $0x68] sm:$0xff]
    %v568 = vld [vmem:[#allocation2 + $0x70] sm:$0xff]
    %v569 = vld [vmem:[#allocation2 + $0x78] sm:$0xff]
    %570 = vmax.xlane.f32.xlu0 %v538
    %v571 = vpop.xlane.xlu0 %570
    %572 = vmax.xlane.f32.xlu0 %v539
    %v573 = vpop.xlane.xlu0 %572
    %574 = vmax.xlane.f32.xlu0 %v540
    %v575 = vpop.xlane.xlu0 %574
    %576 = vmax.xlane.f32.xlu0 %v541
    %v577 = vpop.xlane.xlu0 %576
    %578 = vmax.xlane.f32.xlu0 %v542
    %v579 = vpop.xlane.xlu0 %578
    %580 = vmax.xlane.f32.xlu0 %v543
    %v581 = vpop.xlane.xlu0 %580
    %582 = vmax.xlane.f32.xlu0 %v544
    %v583 = vpop.xlane.xlu0 %582
    %584 = vmax.xlane.f32.xlu0 %v545
    %v585 = vpop.xlane.xlu0 %584
    %586 = vmax.xlane.f32.xlu0 %v546
    %v587 = vpop.xlane.xlu0 %586
    %588 = vmax.xlane.f32.xlu0 %v547
    %v589 = vpop.xlane.xlu0 %588
    %590 = vmax.xlane.f32.xlu0 %v548
    %v591 = vpop.xlane.xlu0 %590
    %592 = vmax.xlane.f32.xlu0 %v549
    %v593 = vpop.xlane.xlu0 %592
    %594 = vmax.xlane.f32.xlu0 %v550
    %v595 = vpop.xlane.xlu0 %594
    %596 = vmax.xlane.f32.xlu0 %v551
    %v597 = vpop.xlane.xlu0 %596
    %598 = vmax.xlane.f32.xlu0 %v552
    %v599 = vpop.xlane.xlu0 %598
    %600 = vmax.xlane.f32.xlu0 %v553
    %v601 = vpop.xlane.xlu0 %600
    %v602 = vmax.f32 %v554, %v571
    %v603 = vmax.f32 %v555, %v573
    %v604 = vmax.f32 %v556, %v575
    %v605 = vmax.f32 %v557, %v577
    %v606 = vmax.f32 %v558, %v579
    %v607 = vmax.f32 %v559, %v581
    %v608 = vmax.f32 %v560, %v583
    %v609 = vmax.f32 %v561, %v585
    %v610 = vmax.f32 %v562, %v587
    %v611 = vmax.f32 %v563, %v589
    %v612 = vmax.f32 %v564, %v591
    %v613 = vmax.f32 %v565, %v593
    %v614 = vmax.f32 %v566, %v595
    %v615 = vmax.f32 %v567, %v597
    %v616 = vmax.f32 %v568, %v599
    %v617 = vmax.f32 %v569, %v601
    %619 = vset.pattern.permute.xlu0 0
    %620 = vperm.xlu0 %619, %v602
    %v621 = vpop.permute.xlu0 %620
    %624 = vset.pattern.permute.xlu0 0
    %625 = vperm.xlu0 %624, %v603
    %v626 = vpop.permute.xlu0 %625
    %629 = vset.pattern.permute.xlu0 0
    %630 = vperm.xlu0 %629, %v604
    %v631 = vpop.permute.xlu0 %630
    %634 = vset.pattern.permute.xlu0 0
    %635 = vperm.xlu0 %634, %v605
    %v636 = vpop.permute.xlu0 %635
    %639 = vset.pattern.permute.xlu0 0
    %640 = vperm.xlu0 %639, %v606
    %v641 = vpop.permute.xlu0 %640
    %644 = vset.pattern.permute.xlu0 0
    %645 = vperm.xlu0 %644, %v607
    %v646 = vpop.permute.xlu0 %645
    %649 = vset.pattern.permute.xlu0 0
    %650 = vperm.xlu0 %649, %v608
    %v651 = vpop.permute.xlu0 %650
    %654 = vset.pattern.permute.xlu0 0
    %655 = vperm.xlu0 %654, %v609
    %v656 = vpop.permute.xlu0 %655
    %659 = vset.pattern.permute.xlu0 0
    %660 = vperm.xlu0 %659, %v610
    %v661 = vpop.permute.xlu0 %660
    %664 = vset.pattern.permute.xlu0 0
    %665 = vperm.xlu0 %664, %v611
    %v666 = vpop.permute.xlu0 %665
    %669 = vset.pattern.permute.xlu0 0
    %670 = vperm.xlu0 %669, %v612
    %v671 = vpop.permute.xlu0 %670
    %674 = vset.pattern.permute.xlu0 0
    %675 = vperm.xlu0 %674, %v613
    %v676 = vpop.permute.xlu0 %675
    %679 = vset.pattern.permute.xlu0 0
    %680 = vperm.xlu0 %679, %v614
    %v681 = vpop.permute.xlu0 %680
    %684 = vset.pattern.permute.xlu0 0
    %685 = vperm.xlu0 %684, %v615
    %v686 = vpop.permute.xlu0 %685
    %689 = vset.pattern.permute.xlu0 0
    %690 = vperm.xlu0 %689, %v616
    %v691 = vpop.permute.xlu0 %690
    %694 = vset.pattern.permute.xlu0 0
    %695 = vperm.xlu0 %694, %v617
    %v696 = vpop.permute.xlu0 %695
    %v698 = vsub.f32 %v538, %v621
    %v699 = vsub.f32 %v539, %v626
    %v700 = vsub.f32 %v540, %v631
    %v701 = vsub.f32 %v541, %v636
    %v702 = vsub.f32 %v542, %v641
    %v703 = vsub.f32 %v543, %v646
    %v704 = vsub.f32 %v544, %v651
    %v705 = vsub.f32 %v545, %v656
    %v706 = vsub.f32 %v546, %v661
    %v707 = vsub.f32 %v547, %v666
    %v708 = vsub.f32 %v548, %v671
    %v709 = vsub.f32 %v549, %v676
    %v710 = vsub.f32 %v550, %v681
    %v711 = vsub.f32 %v551, %v686
    %v712 = vsub.f32 %v552, %v691
    %v713 = vsub.f32 %v553, %v696
    %v714 = vmul.f32 %v698, 1.442695
    %v715 = vpow.pop %v714
    %v716 = vmul.f32 %v699, 1.442695
    %v717 = vpow.pop %v716
    %v718 = vmul.f32 %v700, 1.442695
    %v719 = vpow.pop %v718
    %v720 = vmul.f32 %v701, 1.442695
    %v721 = vpow.pop %v720
    %v722 = vmul.f32 %v702, 1.442695
    %v723 = vpow.pop %v722
    %v724 = vmul.f32 %v703, 1.442695
    %v725 = vpow.pop %v724
    %v726 = vmul.f32 %v704, 1.442695
    %v727 = vpow.pop %v726
    %v728 = vmul.f32 %v705, 1.442695
    %v729 = vpow.pop %v728
    %v730 = vmul.f32 %v706, 1.442695
    %v731 = vpow.pop %v730
    %v732 = vmul.f32 %v707, 1.442695
    %v733 = vpow.pop %v732
    %v734 = vmul.f32 %v708, 1.442695
    %v735 = vpow.pop %v734
    %v736 = vmul.f32 %v709, 1.442695
    %v737 = vpow.pop %v736
    %v738 = vmul.f32 %v710, 1.442695
    %v739 = vpow.pop %v738
    %v740 = vmul.f32 %v711, 1.442695
    %v741 = vpow.pop %v740
    %v742 = vmul.f32 %v712, 1.442695
    %v743 = vpow.pop %v742
    %v744 = vmul.f32 %v713, 1.442695
    %v745 = vpow.pop %v744
    %v746 = vsel %vm247, %v715, 0.0
    %v747 = vsel %vm248, %v717, 0.0
    %v748 = vsel %vm249, %v719, 0.0
    %v749 = vsel %vm250, %v721, 0.0
    %v750 = vsel %vm251, %v723, 0.0
    %v751 = vsel %vm252, %v725, 0.0
    %v752 = vsel %vm253, %v727, 0.0
    %v753 = vsel %vm254, %v729, 0.0
    %v754 = vsel %vm255, %v731, 0.0
    %v755 = vsel %vm256, %v733, 0.0
    %v756 = vsel %vm257, %v735, 0.0
    %v757 = vsel %vm258, %v737, 0.0
    %v758 = vsel %vm259, %v739, 0.0
    %v759 = vsel %vm260, %v741, 0.0
    %v760 = vsel %vm261, %v743, 0.0
    %v761 = vsel %vm262, %v745, 0.0
    %v762 = vsub.f32 %v554, %v602
    %v763 = vsub.f32 %v555, %v603
    %v764 = vsub.f32 %v556, %v604
    %v765 = vsub.f32 %v557, %v605
    %v766 = vsub.f32 %v558, %v606
    %v767 = vsub.f32 %v559, %v607
    %v768 = vsub.f32 %v560, %v608
    %v769 = vsub.f32 %v561, %v609
    %v770 = vsub.f32 %v562, %v610
    %v771 = vsub.f32 %v563, %v611
    %v772 = vsub.f32 %v564, %v612
    %v773 = vsub.f32 %v565, %v613
    %v774 = vsub.f32 %v566, %v614
    %v775 = vsub.f32 %v567, %v615
    %v776 = vsub.f32 %v568, %v616
    %v777 = vsub.f32 %v569, %v617
    %v778 = vmul.f32 %v762, 1.442695
    %v779 = vpow.pop %v778
    %v780 = vmul.f32 %v763, 1.442695
    %v781 = vpow.pop %v780
    %v782 = vmul.f32 %v764, 1.442695
    %v783 = vpow.pop %v782
    %v784 = vmul.f32 %v765, 1.442695
    %v785 = vpow.pop %v784
    %v786 = vmul.f32 %v766, 1.442695
    %v787 = vpow.pop %v786
    %v788 = vmul.f32 %v767, 1.442695
    %v789 = vpow.pop %v788
    %v790 = vmul.f32 %v768, 1.442695
    %v791 = vpow.pop %v790
    %v792 = vmul.f32 %v769, 1.442695
    %v793 = vpow.pop %v792
    %v794 = vmul.f32 %v770, 1.442695
    %v795 = vpow.pop %v794
    %v796 = vmul.f32 %v771, 1.442695
    %v797 = vpow.pop %v796
    %v798 = vmul.f32 %v772, 1.442695
    %v799 = vpow.pop %v798
    %v800 = vmul.f32 %v773, 1.442695
    %v801 = vpow.pop %v800
    %v802 = vmul.f32 %v774, 1.442695
    %v803 = vpow.pop %v802
    %v804 = vmul.f32 %v775, 1.442695
    %v805 = vpow.pop %v804
    %v806 = vmul.f32 %v776, 1.442695
    %v807 = vpow.pop %v806
    %v808 = vmul.f32 %v777, 1.442695
    %v809 = vpow.pop %v808
    %v810 = vld [vmem:[#allocation3] sm:$0xff]
    %v811 = vld [vmem:[#allocation3 + $0x8] sm:$0xff]
    %v812 = vld [vmem:[#allocation3 + $0x10] sm:$0xff]
    %v813 = vld [vmem:[#allocation3 + $0x18] sm:$0xff]
    %v814 = vld [vmem:[#allocation3 + $0x20] sm:$0xff]
    %v815 = vld [vmem:[#allocation3 + $0x28] sm:$0xff]
    %v816 = vld [vmem:[#allocation3 + $0x30] sm:$0xff]
    %v817 = vld [vmem:[#allocation3 + $0x38] sm:$0xff]
    %v818 = vld [vmem:[#allocation3 + $0x40] sm:$0xff]
    %v819 = vld [vmem:[#allocation3 + $0x48] sm:$0xff]
    %v820 = vld [vmem:[#allocation3 + $0x50] sm:$0xff]
    %v821 = vld [vmem:[#allocation3 + $0x58] sm:$0xff]
    %v822 = vld [vmem:[#allocation3 + $0x60] sm:$0xff]
    %v823 = vld [vmem:[#allocation3 + $0x68] sm:$0xff]
    %v824 = vld [vmem:[#allocation3 + $0x70] sm:$0xff]
    %v825 = vld [vmem:[#allocation3 + $0x78] sm:$0xff]
    %v826 = vmul.f32 %v779, %v810
    %v827 = vmul.f32 %v781, %v811
    %v828 = vmul.f32 %v783, %v812
    %v829 = vmul.f32 %v785, %v813
    %v830 = vmul.f32 %v787, %v814
    %v831 = vmul.f32 %v789, %v815
    %v832 = vmul.f32 %v791, %v816
    %v833 = vmul.f32 %v793, %v817
    %v834 = vmul.f32 %v795, %v818
    %v835 = vmul.f32 %v797, %v819
    %v836 = vmul.f32 %v799, %v820
    %v837 = vmul.f32 %v801, %v821
    %v838 = vmul.f32 %v803, %v822
    %v839 = vmul.f32 %v805, %v823
    %v840 = vmul.f32 %v807, %v824
    %v841 = vmul.f32 %v809, %v825
    %842 = vadd.xlane.f32.xlu0 %v746
    %v843 = vpop.xlane.xlu0 %842
    %844 = vadd.xlane.f32.xlu0 %v747
    %v845 = vpop.xlane.xlu0 %844
    %846 = vadd.xlane.f32.xlu0 %v748
    %v847 = vpop.xlane.xlu0 %846
    %848 = vadd.xlane.f32.xlu0 %v749
    %v849 = vpop.xlane.xlu0 %848
    %850 = vadd.xlane.f32.xlu0 %v750
    %v851 = vpop.xlane.xlu0 %850
    %852 = vadd.xlane.f32.xlu0 %v751
    %v853 = vpop.xlane.xlu0 %852
    %854 = vadd.xlane.f32.xlu0 %v752
    %v855 = vpop.xlane.xlu0 %854
    %856 = vadd.xlane.f32.xlu0 %v753
    %v857 = vpop.xlane.xlu0 %856
    %858 = vadd.xlane.f32.xlu0 %v754
    %v859 = vpop.xlane.xlu0 %858
    %860 = vadd.xlane.f32.xlu0 %v755
    %v861 = vpop.xlane.xlu0 %860
    %862 = vadd.xlane.f32.xlu0 %v756
    %v863 = vpop.xlane.xlu0 %862
    %864 = vadd.xlane.f32.xlu0 %v757
    %v865 = vpop.xlane.xlu0 %864
    %866 = vadd.xlane.f32.xlu0 %v758
    %v867 = vpop.xlane.xlu0 %866
    %868 = vadd.xlane.f32.xlu0 %v759
    %v869 = vpop.xlane.xlu0 %868
    %870 = vadd.xlane.f32.xlu0 %v760
    %v871 = vpop.xlane.xlu0 %870
    %872 = vadd.xlane.f32.xlu0 %v761
    %v873 = vpop.xlane.xlu0 %872
    %v874 = vadd.f32 %v826, %v843
    %v875 = vadd.f32 %v827, %v845
    %v876 = vadd.f32 %v828, %v847
    %v877 = vadd.f32 %v829, %v849
    %v878 = vadd.f32 %v830, %v851
    %v879 = vadd.f32 %v831, %v853
    %v880 = vadd.f32 %v832, %v855
    %v881 = vadd.f32 %v833, %v857
    %v882 = vadd.f32 %v834, %v859
    %v883 = vadd.f32 %v835, %v861
    %v884 = vadd.f32 %v836, %v863
    %v885 = vadd.f32 %v837, %v865
    %v886 = vadd.f32 %v838, %v867
    %v887 = vadd.f32 %v839, %v869
    %v888 = vadd.f32 %v840, %v871
    %v889 = vadd.f32 %v841, %v873
    %vm890 = vcmask 7168
    %891 = vst.msk [vmem:[#allocation3] sm:$0xff] %vm890, %v874
    %892 = vst.msk [vmem:[#allocation3 + $0x8] sm:$0xff] %vm890, %v875
    %893 = vst.msk [vmem:[#allocation3 + $0x10] sm:$0xff] %vm890, %v876
    %894 = vst.msk [vmem:[#allocation3 + $0x18] sm:$0xff] %vm890, %v877
    %895 = vst.msk [vmem:[#allocation3 + $0x20] sm:$0xff] %vm890, %v878
    %896 = vst.msk [vmem:[#allocation3 + $0x28] sm:$0xff] %vm890, %v879
    %897 = vst.msk [vmem:[#allocation3 + $0x30] sm:$0xff] %vm890, %v880
    %898 = vst.msk [vmem:[#allocation3 + $0x38] sm:$0xff] %vm890, %v881
    %899 = vst.msk [vmem:[#allocation3 + $0x40] sm:$0xff] %vm890, %v882
    %900 = vst.msk [vmem:[#allocation3 + $0x48] sm:$0xff] %vm890, %v883
    %901 = vst.msk [vmem:[#allocation3 + $0x50] sm:$0xff] %vm890, %v884
    %902 = vst.msk [vmem:[#allocation3 + $0x58] sm:$0xff] %vm890, %v885
    %903 = vst.msk [vmem:[#allocation3 + $0x60] sm:$0xff] %vm890, %v886
    %904 = vst.msk [vmem:[#allocation3 + $0x68] sm:$0xff] %vm890, %v887
    %905 = vst.msk [vmem:[#allocation3 + $0x70] sm:$0xff] %vm890, %v888
    %906 = vst.msk [vmem:[#allocation3 + $0x78] sm:$0xff] %vm890, %v889
    %v907 = vld [vmem:[#allocation4] sm:$0xff]
    %v908 = vld [vmem:[#allocation4 + $0x8] sm:$0xff]
    %v909 = vld [vmem:[#allocation4 + $0x10] sm:$0xff]
    %v910 = vld [vmem:[#allocation4 + $0x18] sm:$0xff]
    %v911 = vld [vmem:[#allocation4 + $0x20] sm:$0xff]
    %v912 = vld [vmem:[#allocation4 + $0x28] sm:$0xff]
    %v913 = vld [vmem:[#allocation4 + $0x30] sm:$0xff]
    %v914 = vld [vmem:[#allocation4 + $0x38] sm:$0xff]
    %v915 = vld [vmem:[#allocation4 + $0x40] sm:$0xff]
    %v916 = vld [vmem:[#allocation4 + $0x48] sm:$0xff]
    %v917 = vld [vmem:[#allocation4 + $0x50] sm:$0xff]
    %v918 = vld [vmem:[#allocation4 + $0x58] sm:$0xff]
    %v919 = vld [vmem:[#allocation4 + $0x60] sm:$0xff]
    %v920 = vld [vmem:[#allocation4 + $0x68] sm:$0xff]
    %v921 = vld [vmem:[#allocation4 + $0x70] sm:$0xff]
    %v922 = vld [vmem:[#allocation4 + $0x78] sm:$0xff]
    %924 = vset.pattern.permute.xlu0 0
    %925 = vperm.xlu0 %924, %v779
    %v926 = vpop.permute.xlu0 %925
    %929 = vset.pattern.permute.xlu0 0
    %930 = vperm.xlu0 %929, %v781
    %v931 = vpop.permute.xlu0 %930
    %934 = vset.pattern.permute.xlu0 0
    %935 = vperm.xlu0 %934, %v783
    %v936 = vpop.permute.xlu0 %935
    %939 = vset.pattern.permute.xlu0 0
    %940 = vperm.xlu0 %939, %v785
    %v941 = vpop.permute.xlu0 %940
    %944 = vset.pattern.permute.xlu0 0
    %945 = vperm.xlu0 %944, %v787
    %v946 = vpop.permute.xlu0 %945
    %949 = vset.pattern.permute.xlu0 0
    %950 = vperm.xlu0 %949, %v789
    %v951 = vpop.permute.xlu0 %950
    %954 = vset.pattern.permute.xlu0 0
    %955 = vperm.xlu0 %954, %v791
    %v956 = vpop.permute.xlu0 %955
    %959 = vset.pattern.permute.xlu0 0
    %960 = vperm.xlu0 %959, %v793
    %v961 = vpop.permute.xlu0 %960
    %964 = vset.pattern.permute.xlu0 0
    %965 = vperm.xlu0 %964, %v795
    %v966 = vpop.permute.xlu0 %965
    %969 = vset.pattern.permute.xlu0 0
    %970 = vperm.xlu0 %969, %v797
    %v971 = vpop.permute.xlu0 %970
    %974 = vset.pattern.permute.xlu0 0
    %975 = vperm.xlu0 %974, %v799
    %v976 = vpop.permute.xlu0 %975
    %979 = vset.pattern.permute.xlu0 0
    %980 = vperm.xlu0 %979, %v801
    %v981 = vpop.permute.xlu0 %980
    %984 = vset.pattern.permute.xlu0 0
    %985 = vperm.xlu0 %984, %v803
    %v986 = vpop.permute.xlu0 %985
    %989 = vset.pattern.permute.xlu0 0
    %990 = vperm.xlu0 %989, %v805
    %v991 = vpop.permute.xlu0 %990
    %994 = vset.pattern.permute.xlu0 0
    %995 = vperm.xlu0 %994, %v807
    %v996 = vpop.permute.xlu0 %995
    %999 = vset.pattern.permute.xlu0 0
    %1000 = vperm.xlu0 %999, %v809
    %v1001 = vpop.permute.xlu0 %1000
    %v1003 = vmul.f32 %v926, %v907
    %v1004 = vmul.f32 %v931, %v908
    %v1005 = vmul.f32 %v936, %v909
    %v1006 = vmul.f32 %v941, %v910
    %v1007 = vmul.f32 %v946, %v911
    %v1008 = vmul.f32 %v951, %v912
    %v1009 = vmul.f32 %v956, %v913
    %v1010 = vmul.f32 %v961, %v914
    %v1011 = vmul.f32 %v966, %v915
    %v1012 = vmul.f32 %v971, %v916
    %v1013 = vmul.f32 %v976, %v917
    %v1014 = vmul.f32 %v981, %v918
    %v1015 = vmul.f32 %v986, %v919
    %v1016 = vmul.f32 %v991, %v920
    %v1017 = vmul.f32 %v996, %v921
    %v1018 = vmul.f32 %v1001, %v922
    %v1019 = vpack.c.bf16 %v747, %v746
    %v1020 = vpack.c.bf16 %v749, %v748
    %v1021 = vpack.c.bf16 %v751, %v750
    %v1022 = vpack.c.bf16 %v753, %v752
    %v1023 = vpack.c.bf16 %v755, %v754
    %v1024 = vpack.c.bf16 %v757, %v756
    %v1025 = vpack.c.bf16 %v759, %v758
    %v1026 = vpack.c.bf16 %v761, %v760
    %v1027 = vpack.c.bf16 %v347, %v345
    %v1028 = vpack.c.bf16 %v352, %v350
    %v1029 = vpack.c.bf16 %v357, %v355
    %v1030 = vpack.c.bf16 %v362, %v360
    %v1031 = vpack.c.bf16 %v367, %v365
    %v1032 = vpack.c.bf16 %v372, %v370
    %v1033 = vpack.c.bf16 %v377, %v375
    %v1034 = vpack.c.bf16 %v382, %v380
    %1035 = vmatpush.bf16.msra.mxu0 %v1034
    %1036 = vmatpush.bf16.msra.mxu0 %v1033
    %1037 = vmatpush.bf16.msra.mxu0 %v1032
    %1038 = vmatpush.bf16.msra.mxu0 %v1031
    %1039 = vmatpush.bf16.msra.mxu0 %v1030
    %1040 = vmatpush.bf16.msra.mxu0 %v1029
    %1041 = vmatpush.bf16.msra.mxu0 %v1028
    %1042 = vmatpush.bf16.msra.mxu0 %v1027
    %1043 = vmatmul.bf16.gmra.mxu0 %v1019
    %v1044 = vpop.f32.mrf.mxu0
    %v1045 = vadd.f32 0.0, %v1044
    %v1046 = vpop.f32.mrf.mxu0
    %v1047 = vadd.f32 0.0, %v1046
    %1048 = vmatmul.bf16.gmra.mxu0 %v1020
    %v1049 = vpop.f32.mrf.mxu0
    %v1050 = vadd.f32 0.0, %v1049
    %v1051 = vpop.f32.mrf.mxu0
    %v1052 = vadd.f32 0.0, %v1051
    %1053 = vmatmul.bf16.gmra.mxu0 %v1021
    %v1054 = vpop.f32.mrf.mxu0
    %v1055 = vadd.f32 0.0, %v1054
    %v1056 = vpop.f32.mrf.mxu0
    %v1057 = vadd.f32 0.0, %v1056
    %1058 = vmatmul.bf16.gmra.mxu0 %v1022
    %v1059 = vpop.f32.mrf.mxu0
    %v1060 = vadd.f32 0.0, %v1059
    %v1061 = vpop.f32.mrf.mxu0
    %v1062 = vadd.f32 0.0, %v1061
    %1063 = vmatmul.bf16.gmra.mxu0 %v1023
    %v1064 = vpop.f32.mrf.mxu0
    %v1065 = vadd.f32 0.0, %v1064
    %v1066 = vpop.f32.mrf.mxu0
    %v1067 = vadd.f32 0.0, %v1066
    %1068 = vmatmul.bf16.gmra.mxu0 %v1024
    %v1069 = vpop.f32.mrf.mxu0
    %v1070 = vadd.f32 0.0, %v1069
    %v1071 = vpop.f32.mrf.mxu0
    %v1072 = vadd.f32 0.0, %v1071
    %1073 = vmatmul.bf16.gmra.mxu0 %v1025
    %v1074 = vpop.f32.mrf.mxu0
    %v1075 = vadd.f32 0.0, %v1074
    %v1076 = vpop.f32.mrf.mxu0
    %v1077 = vadd.f32 0.0, %v1076
    %1078 = vmatmul.bf16.gmra.mxu0 %v1026
    %v1079 = vpop.f32.mrf.mxu0
    %v1080 = vadd.f32 0.0, %v1079
    %v1081 = vpop.f32.mrf.mxu0
    %v1082 = vadd.f32 0.0, %v1081
    %1083 = vdwg.mxu0
    %v1084 = vadd.f32 %v1003, %v1045
    %v1085 = vadd.f32 %v1004, %v1047
    %v1086 = vadd.f32 %v1005, %v1050
    %v1087 = vadd.f32 %v1006, %v1052
    %v1088 = vadd.f32 %v1007, %v1055
    %v1089 = vadd.f32 %v1008, %v1057
    %v1090 = vadd.f32 %v1009, %v1060
    %v1091 = vadd.f32 %v1010, %v1062
    %v1092 = vadd.f32 %v1011, %v1065
    %v1093 = vadd.f32 %v1012, %v1067
    %v1094 = vadd.f32 %v1013, %v1070
    %v1095 = vadd.f32 %v1014, %v1072
    %v1096 = vadd.f32 %v1015, %v1075
    %v1097 = vadd.f32 %v1016, %v1077
    %v1098 = vadd.f32 %v1017, %v1080
    %v1099 = vadd.f32 %v1018, %v1082
    %1100 = vst [vmem:[#allocation4] sm:$0xff] %v1084
    %1101 = vst [vmem:[#allocation4 + $0x8] sm:$0xff] %v1085
    %1102 = vst [vmem:[#allocation4 + $0x10] sm:$0xff] %v1086
    %1103 = vst [vmem:[#allocation4 + $0x18] sm:$0xff] %v1087
    %1104 = vst [vmem:[#allocation4 + $0x20] sm:$0xff] %v1088
    %1105 = vst [vmem:[#allocation4 + $0x28] sm:$0xff] %v1089
    %1106 = vst [vmem:[#allocation4 + $0x30] sm:$0xff] %v1090
    %1107 = vst [vmem:[#allocation4 + $0x38] sm:$0xff] %v1091
    %1108 = vst [vmem:[#allocation4 + $0x40] sm:$0xff] %v1092
    %1109 = vst [vmem:[#allocation4 + $0x48] sm:$0xff] %v1093
    %1110 = vst [vmem:[#allocation4 + $0x50] sm:$0xff] %v1094
    %1111 = vst [vmem:[#allocation4 + $0x58] sm:$0xff] %v1095
    %1112 = vst [vmem:[#allocation4 + $0x60] sm:$0xff] %v1096
    %1113 = vst [vmem:[#allocation4 + $0x68] sm:$0xff] %v1097
    %1114 = vst [vmem:[#allocation4 + $0x70] sm:$0xff] %v1098
    %1115 = vst [vmem:[#allocation4 + $0x78] sm:$0xff] %v1099
    %1116 = vst.msk [vmem:[#allocation2] sm:$0xff] %vm890, %v602
    %1117 = vst.msk [vmem:[#allocation2 + $0x8] sm:$0xff] %vm890, %v603
    %1118 = vst.msk [vmem:[#allocation2 + $0x10] sm:$0xff] %vm890, %v604
    %1119 = vst.msk [vmem:[#allocation2 + $0x18] sm:$0xff] %vm890, %v605
    %1120 = vst.msk [vmem:[#allocation2 + $0x20] sm:$0xff] %vm890, %v606
    %1121 = vst.msk [vmem:[#allocation2 + $0x28] sm:$0xff] %vm890, %v607
    %1122 = vst.msk [vmem:[#allocation2 + $0x30] sm:$0xff] %vm890, %v608
    %1123 = vst.msk [vmem:[#allocation2 + $0x38] sm:$0xff] %vm890, %v609
    %1124 = vst.msk [vmem:[#allocation2 + $0x40] sm:$0xff] %vm890, %v610
    %1125 = vst.msk [vmem:[#allocation2 + $0x48] sm:$0xff] %vm890, %v611
    %1126 = vst.msk [vmem:[#allocation2 + $0x50] sm:$0xff] %vm890, %v612
    %1127 = vst.msk [vmem:[#allocation2 + $0x58] sm:$0xff] %vm890, %v613
    %1128 = vst.msk [vmem:[#allocation2 + $0x60] sm:$0xff] %vm890, %v614
    %1129 = vst.msk [vmem:[#allocation2 + $0x68] sm:$0xff] %vm890, %v615
    %1130 = vst.msk [vmem:[#allocation2 + $0x70] sm:$0xff] %vm890, %v616
    %1131 = vst.msk [vmem:[#allocation2 + $0x78] sm:$0xff] %vm890, %v617
    // Predicated region
    $region70: #{tpu_custom_call.1} parent=1 // pred_check
      %p1132 = pneg %p130
    $region71: #{tpu_custom_call.1} parent=1 // pred_check_branch
      %1134 = sbr.rel (%p1132) target = $region73
    $region72: #{tpu_custom_call.1} parent=1 // pred_region
      %v1135 = vld [vmem:[#allocation3] sm:$0xff]
      %v1136 = vld [vmem:[#allocation3 + $0x8] sm:$0xff]
      %v1137 = vld [vmem:[#allocation3 + $0x10] sm:$0xff]
      %v1138 = vld [vmem:[#allocation3 + $0x18] sm:$0xff]
      %v1139 = vld [vmem:[#allocation3 + $0x20] sm:$0xff]
      %v1140 = vld [vmem:[#allocation3 + $0x28] sm:$0xff]
      %v1141 = vld [vmem:[#allocation3 + $0x30] sm:$0xff]
      %v1142 = vld [vmem:[#allocation3 + $0x38] sm:$0xff]
      %v1143 = vld [vmem:[#allocation3 + $0x40] sm:$0xff]
      %v1144 = vld [vmem:[#allocation3 + $0x48] sm:$0xff]
      %v1145 = vld [vmem:[#allocation3 + $0x50] sm:$0xff]
      %v1146 = vld [vmem:[#allocation3 + $0x58] sm:$0xff]
      %v1147 = vld [vmem:[#allocation3 + $0x60] sm:$0xff]
      %v1148 = vld [vmem:[#allocation3 + $0x68] sm:$0xff]
      %v1149 = vld [vmem:[#allocation3 + $0x70] sm:$0xff]
      %v1150 = vld [vmem:[#allocation3 + $0x78] sm:$0xff]
      %v1151 = vmax.f32 %v1135, 1e-09
      %v1152 = vmax.f32 %v1136, 1e-09
      %v1153 = vmax.f32 %v1137, 1e-09
      %v1154 = vmax.f32 %v1138, 1e-09
      %v1155 = vmax.f32 %v1139, 1e-09
      %v1156 = vmax.f32 %v1140, 1e-09
      %v1157 = vmax.f32 %v1141, 1e-09
      %v1158 = vmax.f32 %v1142, 1e-09
      %v1159 = vmax.f32 %v1143, 1e-09
      %v1160 = vmax.f32 %v1144, 1e-09
      %v1161 = vmax.f32 %v1145, 1e-09
      %v1162 = vmax.f32 %v1146, 1e-09
      %v1163 = vmax.f32 %v1147, 1e-09
      %v1164 = vmax.f32 %v1148, 1e-09
      %v1165 = vmax.f32 %v1149, 1e-09
      %v1166 = vmax.f32 %v1150, 1e-09
      %v1167 = vld [vmem:[#allocation4] sm:$0xff]
      %v1168 = vld [vmem:[#allocation4 + $0x8] sm:$0xff]
      %v1169 = vld [vmem:[#allocation4 + $0x10] sm:$0xff]
      %v1170 = vld [vmem:[#allocation4 + $0x18] sm:$0xff]
      %v1171 = vld [vmem:[#allocation4 + $0x20] sm:$0xff]
      %v1172 = vld [vmem:[#allocation4 + $0x28] sm:$0xff]
      %v1173 = vld [vmem:[#allocation4 + $0x30] sm:$0xff]
      %v1174 = vld [vmem:[#allocation4 + $0x38] sm:$0xff]
      %v1175 = vld [vmem:[#allocation4 + $0x40] sm:$0xff]
      %v1176 = vld [vmem:[#allocation4 + $0x48] sm:$0xff]
      %v1177 = vld [vmem:[#allocation4 + $0x50] sm:$0xff]
      %v1178 = vld [vmem:[#allocation4 + $0x58] sm:$0xff]
      %v1179 = vld [vmem:[#allocation4 + $0x60] sm:$0xff]
      %v1180 = vld [vmem:[#allocation4 + $0x68] sm:$0xff]
      %v1181 = vld [vmem:[#allocation4 + $0x70] sm:$0xff]
      %v1182 = vld [vmem:[#allocation4 + $0x78] sm:$0xff]
      %v1183 = vrcp.pop %v1151
      %v1184 = vrcp.pop %v1152
      %v1185 = vrcp.pop %v1153
      %v1186 = vrcp.pop %v1154
      %v1187 = vrcp.pop %v1155
      %v1188 = vrcp.pop %v1156
      %v1189 = vrcp.pop %v1157
      %v1190 = vrcp.pop %v1158
      %v1191 = vrcp.pop %v1159
      %v1192 = vrcp.pop %v1160
      %v1193 = vrcp.pop %v1161
      %v1194 = vrcp.pop %v1162
      %v1195 = vrcp.pop %v1163
      %v1196 = vrcp.pop %v1164
      %v1197 = vrcp.pop %v1165
      %v1198 = vrcp.pop %v1166
      %1200 = vset.pattern.permute.xlu0 0
      %1201 = vperm.xlu0 %1200, %v1183
      %v1202 = vpop.permute.xlu0 %1201
      %1205 = vset.pattern.permute.xlu0 0
      %1206 = vperm.xlu0 %1205, %v1184
      %v1207 = vpop.permute.xlu0 %1206
      %1210 = vset.pattern.permute.xlu0 0
      %1211 = vperm.xlu0 %1210, %v1185
      %v1212 = vpop.permute.xlu0 %1211
      %1215 = vset.pattern.permute.xlu0 0
      %1216 = vperm.xlu0 %1215, %v1186
      %v1217 = vpop.permute.xlu0 %1216
      %1220 = vset.pattern.permute.xlu0 0
      %1221 = vperm.xlu0 %1220, %v1187
      %v1222 = vpop.permute.xlu0 %1221
      %1225 = vset.pattern.permute.xlu0 0
      %1226 = vperm.xlu0 %1225, %v1188
      %v1227 = vpop.permute.xlu0 %1226
      %1230 = vset.pattern.permute.xlu0 0
      %1231 = vperm.xlu0 %1230, %v1189
      %v1232 = vpop.permute.xlu0 %1231
      %1235 = vset.pattern.permute.xlu0 0
      %1236 = vperm.xlu0 %1235, %v1190
      %v1237 = vpop.permute.xlu0 %1236
      %1240 = vset.pattern.permute.xlu0 0
      %1241 = vperm.xlu0 %1240, %v1191
      %v1242 = vpop.permute.xlu0 %1241
      %1245 = vset.pattern.permute.xlu0 0
      %1246 = vperm.xlu0 %1245, %v1192
      %v1247 = vpop.permute.xlu0 %1246
      %1250 = vset.pattern.permute.xlu0 0
      %1251 = vperm.xlu0 %1250, %v1193
      %v1252 = vpop.permute.xlu0 %1251
      %1255 = vset.pattern.permute.xlu0 0
      %1256 = vperm.xlu0 %1255, %v1194
      %v1257 = vpop.permute.xlu0 %1256
      %1260 = vset.pattern.permute.xlu0 0
      %1261 = vperm.xlu0 %1260, %v1195
      %v1262 = vpop.permute.xlu0 %1261
      %1265 = vset.pattern.permute.xlu0 0
      %1266 = vperm.xlu0 %1265, %v1196
      %v1267 = vpop.permute.xlu0 %1266
      %1270 = vset.pattern.permute.xlu0 0
      %1271 = vperm.xlu0 %1270, %v1197
      %v1272 = vpop.permute.xlu0 %1271
      %1275 = vset.pattern.permute.xlu0 0
      %1276 = vperm.xlu0 %1275, %v1198
      %v1277 = vpop.permute.xlu0 %1276
      %v1279 = vmul.f32 %v1167, %v1202
      %v1280 = vmul.f32 %v1168, %v1207
      %v1281 = vmul.f32 %v1169, %v1212
      %v1282 = vmul.f32 %v1170, %v1217
      %v1283 = vmul.f32 %v1171, %v1222
      %v1284 = vmul.f32 %v1172, %v1227
      %v1285 = vmul.f32 %v1173, %v1232
      %v1286 = vmul.f32 %v1174, %v1237
      %v1287 = vmul.f32 %v1175, %v1242
      %v1288 = vmul.f32 %v1176, %v1247
      %v1289 = vmul.f32 %v1177, %v1252
      %v1290 = vmul.f32 %v1178, %v1257
      %v1291 = vmul.f32 %v1179, %v1262
      %v1292 = vmul.f32 %v1180, %v1267
      %v1293 = vmul.f32 %v1181, %v1272
      %v1294 = vmul.f32 %v1182, %v1277
      %vm1295 = vcmp.gt.f32.partialorder %v1279, 0.0
      %vm1296 = vcmp.gt.f32.partialorder %v1280, 0.0
      %vm1297 = vcmp.gt.f32.partialorder %v1281, 0.0
      %vm1298 = vcmp.gt.f32.partialorder %v1282, 0.0
      %vm1299 = vcmp.gt.f32.partialorder %v1283, 0.0
      %vm1300 = vcmp.gt.f32.partialorder %v1284, 0.0
      %vm1301 = vcmp.gt.f32.partialorder %v1285, 0.0
      %vm1302 = vcmp.gt.f32.partialorder %v1286, 0.0
      %vm1303 = vcmp.gt.f32.partialorder %v1287, 0.0
      %vm1304 = vcmp.gt.f32.partialorder %v1288, 0.0
      %vm1305 = vcmp.gt.f32.partialorder %v1289, 0.0
      %vm1306 = vcmp.gt.f32.partialorder %v1290, 0.0
      %vm1307 = vcmp.gt.f32.partialorder %v1291, 0.0
      %vm1308 = vcmp.gt.f32.partialorder %v1292, 0.0
      %vm1309 = vcmp.gt.f32.partialorder %v1293, 0.0
      %vm1310 = vcmp.gt.f32.partialorder %v1294, 0.0
      %v1311 = vmin.f32 %v1279, 0.0
      %v1312 = vmin.f32 %v1280, 0.0
      %v1313 = vmin.f32 %v1281, 0.0
      %v1314 = vmin.f32 %v1282, 0.0
      %v1315 = vmin.f32 %v1283, 0.0
      %v1316 = vmin.f32 %v1284, 0.0
      %v1317 = vmin.f32 %v1285, 0.0
      %v1318 = vmin.f32 %v1286, 0.0
      %v1319 = vmin.f32 %v1287, 0.0
      %v1320 = vmin.f32 %v1288, 0.0
      %v1321 = vmin.f32 %v1289, 0.0
      %v1322 = vmin.f32 %v1290, 0.0
      %v1323 = vmin.f32 %v1291, 0.0
      %v1324 = vmin.f32 %v1292, 0.0
      %v1325 = vmin.f32 %v1293, 0.0
      %v1326 = vmin.f32 %v1294, 0.0
      %v1327 = vmul.f32 %v1311, 1.442695
      %v1328 = vpow.pop %v1327
      %v1329 = vmul.f32 %v1312, 1.442695
      %v1330 = vpow.pop %v1329
      %v1331 = vmul.f32 %v1313, 1.442695
      %v1332 = vpow.pop %v1331
      %v1333 = vmul.f32 %v1314, 1.442695
      %v1334 = vpow.pop %v1333
      %v1335 = vmul.f32 %v1315, 1.442695
      %v1336 = vpow.pop %v1335
      %v1337 = vmul.f32 %v1316, 1.442695
      %v1338 = vpow.pop %v1337
      %v1339 = vmul.f32 %v1317, 1.442695
      %v1340 = vpow.pop %v1339
      %v1341 = vmul.f32 %v1318, 1.442695
      %v1342 = vpow.pop %v1341
      %v1343 = vmul.f32 %v1319, 1.442695
      %v1344 = vpow.pop %v1343
      %v1345 = vmul.f32 %v1320, 1.442695
      %v1346 = vpow.pop %v1345
      %v1347 = vmul.f32 %v1321, 1.442695
      %v1348 = vpow.pop %v1347
      %v1349 = vmul.f32 %v1322, 1.442695
      %v1350 = vpow.pop %v1349
      %v1351 = vmul.f32 %v1323, 1.442695
      %v1352 = vpow.pop %v1351
      %v1353 = vmul.f32 %v1324, 1.442695
      %v1354 = vpow.pop %v1353
      %v1355 = vmul.f32 %v1325, 1.442695
      %v1356 = vpow.pop %v1355
      %v1357 = vmul.f32 %v1326, 1.442695
      %v1358 = vpow.pop %v1357
      %v1359 = vsub.f32 %v1328, 1.0
      %v1360 = vsub.f32 %v1330, 1.0
      %v1361 = vsub.f32 %v1332, 1.0
      %v1362 = vsub.f32 %v1334, 1.0
      %v1363 = vsub.f32 %v1336, 1.0
      %v1364 = vsub.f32 %v1338, 1.0
      %v1365 = vsub.f32 %v1340, 1.0
      %v1366 = vsub.f32 %v1342, 1.0
      %v1367 = vsub.f32 %v1344, 1.0
      %v1368 = vsub.f32 %v1346, 1.0
      %v1369 = vsub.f32 %v1348, 1.0
      %v1370 = vsub.f32 %v1350, 1.0
      %v1371 = vsub.f32 %v1352, 1.0
      %v1372 = vsub.f32 %v1354, 1.0
      %v1373 = vsub.f32 %v1356, 1.0
      %v1374 = vsub.f32 %v1358, 1.0
      %v1375 = vsel %vm1295, %v1279, %v1359
      %v1376 = vsel %vm1296, %v1280, %v1360
      %v1377 = vsel %vm1297, %v1281, %v1361
      %v1378 = vsel %vm1298, %v1282, %v1362
      %v1379 = vsel %vm1299, %v1283, %v1363
      %v1380 = vsel %vm1300, %v1284, %v1364
      %v1381 = vsel %vm1301, %v1285, %v1365
      %v1382 = vsel %vm1302, %v1286, %v1366
      %v1383 = vsel %vm1303, %v1287, %v1367
      %v1384 = vsel %vm1304, %v1288, %v1368
      %v1385 = vsel %vm1305, %v1289, %v1369
      %v1386 = vsel %vm1306, %v1290, %v1370
      %v1387 = vsel %vm1307, %v1291, %v1371
      %v1388 = vsel %vm1308, %v1292, %v1372
      %v1389 = vsel %vm1309, %v1293, %v1373
      %v1390 = vsel %vm1310, %v1294, %v1374
      %v1391 = vpack.c.bf16 %v1376, %v1375
      %v1392 = vpack.c.bf16 %v1378, %v1377
      %v1393 = vpack.c.bf16 %v1380, %v1379
      %v1394 = vpack.c.bf16 %v1382, %v1381
      %v1395 = vpack.c.bf16 %v1384, %v1383
      %v1396 = vpack.c.bf16 %v1386, %v1385
      %v1397 = vpack.c.bf16 %v1388, %v1387
      %v1398 = vpack.c.bf16 %v1390, %v1389
      %v1399 = vld [vmem:[#allocation13] sm:$0xff]
      %v1400 = vld [vmem:[#allocation13 + $0x8] sm:$0xff]
      %v1401 = vld [vmem:[#allocation13 + $0x10] sm:$0xff]
      %v1402 = vld [vmem:[#allocation13 + $0x18] sm:$0xff]
      %v1403 = vld [vmem:[#allocation13 + $0x20] sm:$0xff]
      %v1404 = vld [vmem:[#allocation13 + $0x28] sm:$0xff]
      %v1405 = vld [vmem:[#allocation13 + $0x30] sm:$0xff]
      %v1406 = vld [vmem:[#allocation13 + $0x38] sm:$0xff]
      %v1407 = vld [vmem:[#allocation13 + $0x40] sm:$0xff]
      %v1408 = vld [vmem:[#allocation13 + $0x48] sm:$0xff]
      %v1409 = vld [vmem:[#allocation13 + $0x50] sm:$0xff]
      %v1410 = vld [vmem:[#allocation13 + $0x58] sm:$0xff]
      %v1411 = vld [vmem:[#allocation13 + $0x60] sm:$0xff]
      %v1412 = vld [vmem:[#allocation13 + $0x68] sm:$0xff]
      %v1413 = vld [vmem:[#allocation13 + $0x70] sm:$0xff]
      %v1414 = vld [vmem:[#allocation13 + $0x78] sm:$0xff]
      %v1415 = vld [vmem:[%s7] sm:$0x3]
      %v1417 = vperm.slane %v1415, 0
      %v1418 = vperm.slane %v1415, 1
      %v1437 = vunpack.c.l.b16 %v1399
      %v1438 = vunpack.c.h.b16 %v1399
      %v1439 = vunpack.c.l.b16 %v1400
      %v1440 = vunpack.c.h.b16 %v1400
      %v1441 = vunpack.c.l.b16 %v1401
      %v1442 = vunpack.c.h.b16 %v1401
      %v1443 = vunpack.c.l.b16 %v1402
      %v1444 = vunpack.c.h.b16 %v1402
      %v1445 = vunpack.c.l.b16 %v1403
      %v1446 = vunpack.c.h.b16 %v1403
      %v1447 = vunpack.c.l.b16 %v1404
      %v1448 = vunpack.c.h.b16 %v1404
      %v1449 = vunpack.c.l.b16 %v1405
      %v1450 = vunpack.c.h.b16 %v1405
      %v1451 = vunpack.c.l.b16 %v1406
      %v1452 = vunpack.c.h.b16 %v1406
      %v1453 = vunpack.c.l.b16 %v1407
      %v1454 = vunpack.c.h.b16 %v1407
      %v1455 = vunpack.c.l.b16 %v1408
      %v1456 = vunpack.c.h.b16 %v1408
      %v1457 = vunpack.c.l.b16 %v1409
      %v1458 = vunpack.c.h.b16 %v1409
      %v1459 = vunpack.c.l.b16 %v1410
      %v1460 = vunpack.c.h.b16 %v1410
      %v1461 = vunpack.c.l.b16 %v1411
      %v1462 = vunpack.c.h.b16 %v1411
      %v1463 = vunpack.c.l.b16 %v1412
      %v1464 = vunpack.c.h.b16 %v1412
      %v1465 = vunpack.c.l.b16 %v1413
      %v1466 = vunpack.c.h.b16 %v1413
      %v1467 = vunpack.c.l.b16 %v1414
      %v1468 = vunpack.c.h.b16 %v1414
      %v1469 = vpack.c.b16 %v1439, %v1437
      %v1470 = vpack.c.b16 %v1440, %v1438
      %v1471 = vpack.c.b16 %v1443, %v1441
      %v1472 = vpack.c.b16 %v1444, %v1442
      %v1473 = vpack.c.b16 %v1447, %v1445
      %v1474 = vpack.c.b16 %v1448, %v1446
      %v1475 = vpack.c.b16 %v1451, %v1449
      %v1476 = vpack.c.b16 %v1452, %v1450
      %v1477 = vpack.c.b16 %v1455, %v1453
      %v1478 = vpack.c.b16 %v1456, %v1454
      %v1479 = vpack.c.b16 %v1459, %v1457
      %v1480 = vpack.c.b16 %v1460, %v1458
      %v1481 = vpack.c.b16 %v1463, %v1461
      %v1482 = vpack.c.b16 %v1464, %v1462
      %v1483 = vpack.c.b16 %v1467, %v1465
      %v1484 = vpack.c.b16 %v1468, %v1466
      %1501 = vmatpush.bf16.msra.mxu0 %v1483
      %1502 = vmatpush.bf16.msra.mxu0 %v1481
      %1503 = vmatpush.bf16.msra.mxu0 %v1479
      %1504 = vmatpush.bf16.msra.mxu0 %v1477
      %1505 = vmatpush.bf16.msra.mxu0 %v1475
      %1506 = vmatpush.bf16.msra.mxu0 %v1473
      %1507 = vmatpush.bf16.msra.mxu0 %v1471
      %1508 = vmatpush.bf16.msra.mxu0 %v1469
      %1509 = vmatmul.bf16.gmra.mxu0 %v1391
      %v1510 = vpop.f32.mrf.mxu0
      %v1511 = vadd.f32 %v1417, %v1510
      %v1512 = vpop.f32.mrf.mxu0
      %v1513 = vadd.f32 %v1417, %v1512
      %1514 = vmatmul.bf16.gmra.mxu0 %v1392
      %v1515 = vpop.f32.mrf.mxu0
      %v1516 = vadd.f32 %v1417, %v1515
      %v1517 = vpop.f32.mrf.mxu0
      %v1518 = vadd.f32 %v1417, %v1517
      %1519 = vmatmul.bf16.gmra.mxu0 %v1393
      %v1520 = vpop.f32.mrf.mxu0
      %v1521 = vadd.f32 %v1417, %v1520
      %v1522 = vpop.f32.mrf.mxu0
      %v1523 = vadd.f32 %v1417, %v1522
      %1524 = vmatmul.bf16.gmra.mxu0 %v1394
      %v1525 = vpop.f32.mrf.mxu0
      %v1526 = vadd.f32 %v1417, %v1525
      %v1527 = vpop.f32.mrf.mxu0
      %v1528 = vadd.f32 %v1417, %v1527
      %1529 = vmatmul.bf16.gmra.mxu0 %v1395
      %v1530 = vpop.f32.mrf.mxu0
      %v1531 = vadd.f32 %v1417, %v1530
      %v1532 = vpop.f32.mrf.mxu0
      %v1533 = vadd.f32 %v1417, %v1532
      %1534 = vmatmul.bf16.gmra.mxu0 %v1396
      %v1535 = vpop.f32.mrf.mxu0
      %v1536 = vadd.f32 %v1417, %v1535
      %v1537 = vpop.f32.mrf.mxu0
      %v1538 = vadd.f32 %v1417, %v1537
      %1539 = vmatmul.bf16.gmra.mxu0 %v1397
      %v1540 = vpop.f32.mrf.mxu0
      %v1541 = vadd.f32 %v1417, %v1540
      %v1542 = vpop.f32.mrf.mxu0
      %v1543 = vadd.f32 %v1417, %v1542
      %1544 = vmatmul.bf16.gmra.mxu0 %v1398
      %v1545 = vpop.f32.mrf.mxu0
      %v1546 = vadd.f32 %v1417, %v1545
      %v1547 = vpop.f32.mrf.mxu0
      %v1548 = vadd.f32 %v1417, %v1547
      %1549 = vdwg.mxu0
      %1550 = vmatpush.bf16.msra.mxu0 %v1484
      %1551 = vmatpush.bf16.msra.mxu0 %v1482
      %1552 = vmatpush.bf16.msra.mxu0 %v1480
      %1553 = vmatpush.bf16.msra.mxu0 %v1478
      %1554 = vmatpush.bf16.msra.mxu0 %v1476
      %1555 = vmatpush.bf16.msra.mxu0 %v1474
      %1556 = vmatpush.bf16.msra.mxu0 %v1472
      %1557 = vmatpush.bf16.msra.mxu0 %v1470
      %1558 = vmatmul.bf16.gmra.mxu0 %v1391
      %v1559 = vpop.f32.mrf.mxu0
      %v1560 = vadd.f32 %v1418, %v1559
      %v1561 = vpop.f32.mrf.mxu0
      %v1562 = vadd.f32 %v1418, %v1561
      %1563 = vmatmul.bf16.gmra.mxu0 %v1392
      %v1564 = vpop.f32.mrf.mxu0
      %v1565 = vadd.f32 %v1418, %v1564
      %v1566 = vpop.f32.mrf.mxu0
      %v1567 = vadd.f32 %v1418, %v1566
      %1568 = vmatmul.bf16.gmra.mxu0 %v1393
      %v1569 = vpop.f32.mrf.mxu0
      %v1570 = vadd.f32 %v1418, %v1569
      %v1571 = vpop.f32.mrf.mxu0
      %v1572 = vadd.f32 %v1418, %v1571
      %1573 = vmatmul.bf16.gmra.mxu0 %v1394
      %v1574 = vpop.f32.mrf.mxu0
      %v1575 = vadd.f32 %v1418, %v1574
      %v1576 = vpop.f32.mrf.mxu0
      %v1577 = vadd.f32 %v1418, %v1576
      %1578 = vmatmul.bf16.gmra.mxu0 %v1395
      %v1579 = vpop.f32.mrf.mxu0
      %v1580 = vadd.f32 %v1418, %v1579
      %v1581 = vpop.f32.mrf.mxu0
      %v1582 = vadd.f32 %v1418, %v1581
      %1583 = vmatmul.bf16.gmra.mxu0 %v1396
      %v1584 = vpop.f32.mrf.mxu0
      %v1585 = vadd.f32 %v1418, %v1584
      %v1586 = vpop.f32.mrf.mxu0
      %v1587 = vadd.f32 %v1418, %v1586
      %1588 = vmatmul.bf16.gmra.mxu0 %v1397
      %v1589 = vpop.f32.mrf.mxu0
      %v1590 = vadd.f32 %v1418, %v1589
      %v1591 = vpop.f32.mrf.mxu0
      %v1592 = vadd.f32 %v1418, %v1591
      %1593 = vmatmul.bf16.gmra.mxu0 %v1398
      %v1594 = vpop.f32.mrf.mxu0
      %v1595 = vadd.f32 %v1418, %v1594
      %v1596 = vpop.f32.mrf.mxu0
      %v1597 = vadd.f32 %v1418, %v1596
      %1598 = vdwg.mxu0
      %v1599 = vmax.f32 %v1511, 0.0
      %v1600 = vmax.f32 %v1560, 0.0
      %v1601 = vmax.f32 %v1513, 0.0
      %v1602 = vmax.f32 %v1562, 0.0
      %v1603 = vmax.f32 %v1516, 0.0
      %v1604 = vmax.f32 %v1565, 0.0
      %v1605 = vmax.f32 %v1518, 0.0
      %v1606 = vmax.f32 %v1567, 0.0
      %v1607 = vmax.f32 %v1521, 0.0
      %v1608 = vmax.f32 %v1570, 0.0
      %v1609 = vmax.f32 %v1523, 0.0
      %v1610 = vmax.f32 %v1572, 0.0
      %v1611 = vmax.f32 %v1526, 0.0
      %v1612 = vmax.f32 %v1575, 0.0
      %v1613 = vmax.f32 %v1528, 0.0
      %v1614 = vmax.f32 %v1577, 0.0
      %v1615 = vmax.f32 %v1531, 0.0
      %v1616 = vmax.f32 %v1580, 0.0
      %v1617 = vmax.f32 %v1533, 0.0
      %v1618 = vmax.f32 %v1582, 0.0
      %v1619 = vmax.f32 %v1536, 0.0
      %v1620 = vmax.f32 %v1585, 0.0
      %v1621 = vmax.f32 %v1538, 0.0
      %v1622 = vmax.f32 %v1587, 0.0
      %v1623 = vmax.f32 %v1541, 0.0
      %v1624 = vmax.f32 %v1590, 0.0
      %v1625 = vmax.f32 %v1543, 0.0
      %v1626 = vmax.f32 %v1592, 0.0
      %v1627 = vmax.f32 %v1546, 0.0
      %v1628 = vmax.f32 %v1595, 0.0
      %v1629 = vmax.f32 %v1548, 0.0
      %v1630 = vmax.f32 %v1597, 0.0
      %v1631 = vpack.c.bf16 %v1601, %v1599
      %v1632 = vpack.c.bf16 %v1602, %v1600
      %v1633 = vpack.c.bf16 %v1605, %v1603
      %v1634 = vpack.c.bf16 %v1606, %v1604
      %v1635 = vpack.c.bf16 %v1609, %v1607
      %v1636 = vpack.c.bf16 %v1610, %v1608
      %v1637 = vpack.c.bf16 %v1613, %v1611
      %v1638 = vpack.c.bf16 %v1614, %v1612
      %v1639 = vpack.c.bf16 %v1617, %v1615
      %v1640 = vpack.c.bf16 %v1618, %v1616
      %v1641 = vpack.c.bf16 %v1621, %v1619
      %v1642 = vpack.c.bf16 %v1622, %v1620
      %v1643 = vpack.c.bf16 %v1625, %v1623
      %v1644 = vpack.c.bf16 %v1626, %v1624
      %v1645 = vpack.c.bf16 %v1629, %v1627
      %v1646 = vpack.c.bf16 %v1630, %v1628
      %v1647 = vld [vmem:[#allocation14] sm:$0xf]
      %v1648 = vld [vmem:[#allocation14 + $0x4] sm:$0xf]
      %v1649 = vld [vmem:[#allocation14 + $0x8] sm:$0xf]
      %v1650 = vld [vmem:[#allocation14 + $0xc] sm:$0xf]
      %v1651 = vld [vmem:[#allocation14 + $0x10] sm:$0xf]
      %v1652 = vld [vmem:[#allocation14 + $0x14] sm:$0xf]
      %v1653 = vld [vmem:[#allocation14 + $0x18] sm:$0xf]
      %v1654 = vld [vmem:[#allocation14 + $0x1c] sm:$0xf]
      %v1655 = vld [vmem:[#allocation14 + $0x20] sm:$0xf]
      %v1656 = vld [vmem:[#allocation14 + $0x24] sm:$0xf]
      %v1657 = vld [vmem:[#allocation14 + $0x28] sm:$0xf]
      %v1658 = vld [vmem:[#allocation14 + $0x2c] sm:$0xf]
      %v1659 = vld [vmem:[#allocation14 + $0x30] sm:$0xf]
      %v1660 = vld [vmem:[#allocation14 + $0x34] sm:$0xf]
      %v1661 = vld [vmem:[#allocation14 + $0x38] sm:$0xf]
      %v1662 = vld [vmem:[#allocation14 + $0x3c] sm:$0xf]
      %v1663 = vld [vmem:[#allocation14 + $0x40] sm:$0xf]
      %v1664 = vld [vmem:[#allocation14 + $0x44] sm:$0xf]
      %v1665 = vld [vmem:[#allocation14 + $0x48] sm:$0xf]
      %v1666 = vld [vmem:[#allocation14 + $0x4c] sm:$0xf]
      %v1667 = vld [vmem:[#allocation14 + $0x50] sm:$0xf]
      %v1668 = vld [vmem:[#allocation14 + $0x54] sm:$0xf]
      %v1669 = vld [vmem:[#allocation14 + $0x58] sm:$0xf]
      %v1670 = vld [vmem:[#allocation14 + $0x5c] sm:$0xf]
      %v1671 = vld [vmem:[#allocation14 + $0x60] sm:$0xf]
      %v1672 = vld [vmem:[#allocation14 + $0x64] sm:$0xf]
      %v1673 = vld [vmem:[#allocation14 + $0x68] sm:$0xf]
      %v1674 = vld [vmem:[#allocation14 + $0x6c] sm:$0xf]
      %v1675 = vld [vmem:[#allocation14 + $0x70] sm:$0xf]
      %v1676 = vld [vmem:[#allocation14 + $0x74] sm:$0xf]
      %v1677 = vld [vmem:[#allocation14 + $0x78] sm:$0xf]
      %v1678 = vld [vmem:[#allocation14 + $0x7c] sm:$0xf]
      %v1711 = vunpack.c.l.b16 %v1647
      %v1712 = vunpack.c.l.b16 %v1648
      %v1713 = vunpack.c.l.b16 %v1649
      %v1714 = vunpack.c.l.b16 %v1650
      %v1715 = vunpack.c.l.b16 %v1651
      %v1716 = vunpack.c.l.b16 %v1652
      %v1717 = vunpack.c.l.b16 %v1653
      %v1718 = vunpack.c.l.b16 %v1654
      %v1719 = vunpack.c.l.b16 %v1655
      %v1720 = vunpack.c.l.b16 %v1656
      %v1721 = vunpack.c.l.b16 %v1657
      %v1722 = vunpack.c.l.b16 %v1658
      %v1723 = vunpack.c.l.b16 %v1659
      %v1724 = vunpack.c.l.b16 %v1660
      %v1725 = vunpack.c.l.b16 %v1661
      %v1726 = vunpack.c.l.b16 %v1662
      %v1727 = vunpack.c.l.b16 %v1663
      %v1728 = vunpack.c.l.b16 %v1664
      %v1729 = vunpack.c.l.b16 %v1665
      %v1730 = vunpack.c.l.b16 %v1666
      %v1731 = vunpack.c.l.b16 %v1667
      %v1732 = vunpack.c.l.b16 %v1668
      %v1733 = vunpack.c.l.b16 %v1669
      %v1734 = vunpack.c.l.b16 %v1670
      %v1735 = vunpack.c.l.b16 %v1671
      %v1736 = vunpack.c.l.b16 %v1672
      %v1737 = vunpack.c.l.b16 %v1673
      %v1738 = vunpack.c.l.b16 %v1674
      %v1739 = vunpack.c.l.b16 %v1675
      %v1740 = vunpack.c.l.b16 %v1676
      %v1741 = vunpack.c.l.b16 %v1677
      %v1742 = vunpack.c.l.b16 %v1678
      %v1743 = vpack.c.b16 %v1712, %v1711
      %v1744 = vpack.c.b16 %v1714, %v1713
      %v1745 = vpack.c.b16 %v1716, %v1715
      %v1746 = vpack.c.b16 %v1718, %v1717
      %v1747 = vpack.c.b16 %v1720, %v1719
      %v1748 = vpack.c.b16 %v1722, %v1721
      %v1749 = vpack.c.b16 %v1724, %v1723
      %v1750 = vpack.c.b16 %v1726, %v1725
      %v1751 = vpack.c.b16 %v1728, %v1727
      %v1752 = vpack.c.b16 %v1730, %v1729
      %v1753 = vpack.c.b16 %v1732, %v1731
      %v1754 = vpack.c.b16 %v1734, %v1733
      %v1755 = vpack.c.b16 %v1736, %v1735
      %v1756 = vpack.c.b16 %v1738, %v1737
      %v1757 = vpack.c.b16 %v1740, %v1739
      %v1758 = vpack.c.b16 %v1742, %v1741
      %1775 = vmatpush.bf16.msra.mxu0 %v1750
      %1776 = vmatpush.bf16.msra.mxu0 %v1749
      %1777 = vmatpush.bf16.msra.mxu0 %v1748
      %1778 = vmatpush.bf16.msra.mxu0 %v1747
      %1779 = vmatpush.bf16.msra.mxu0 %v1746
      %1780 = vmatpush.bf16.msra.mxu0 %v1745
      %1781 = vmatpush.bf16.msra.mxu0 %v1744
      %1782 = vmatpush.bf16.msra.mxu0 %v1743
      %1783 = vmatmul.bf16.gmra.mxu0 %v1631
      %v1784 = vpop.f32.mrf.mxu0
      %v1785 = vadd.f32 0.0, %v1784
      %v1786 = vpop.f32.mrf.mxu0
      %v1787 = vadd.f32 0.0, %v1786
      %1788 = vmatmul.bf16.gmra.mxu0 %v1633
      %v1789 = vpop.f32.mrf.mxu0
      %v1790 = vadd.f32 0.0, %v1789
      %v1791 = vpop.f32.mrf.mxu0
      %v1792 = vadd.f32 0.0, %v1791
      %1793 = vmatmul.bf16.gmra.mxu0 %v1635
      %v1794 = vpop.f32.mrf.mxu0
      %v1795 = vadd.f32 0.0, %v1794
      %v1796 = vpop.f32.mrf.mxu0
      %v1797 = vadd.f32 0.0, %v1796
      %1798 = vmatmul.bf16.gmra.mxu0 %v1637
      %v1799 = vpop.f32.mrf.mxu0
      %v1800 = vadd.f32 0.0, %v1799
      %v1801 = vpop.f32.mrf.mxu0
      %v1802 = vadd.f32 0.0, %v1801
      %1803 = vmatmul.bf16.gmra.mxu0 %v1639
      %v1804 = vpop.f32.mrf.mxu0
      %v1805 = vadd.f32 0.0, %v1804
      %v1806 = vpop.f32.mrf.mxu0
      %v1807 = vadd.f32 0.0, %v1806
      %1808 = vmatmul.bf16.gmra.mxu0 %v1641
      %v1809 = vpop.f32.mrf.mxu0
      %v1810 = vadd.f32 0.0, %v1809
      %v1811 = vpop.f32.mrf.mxu0
      %v1812 = vadd.f32 0.0, %v1811
      %1813 = vmatmul.bf16.gmra.mxu0 %v1643
      %v1814 = vpop.f32.mrf.mxu0
      %v1815 = vadd.f32 0.0, %v1814
      %v1816 = vpop.f32.mrf.mxu0
      %v1817 = vadd.f32 0.0, %v1816
      %1818 = vmatmul.bf16.gmra.mxu0 %v1645
      %v1819 = vpop.f32.mrf.mxu0
      %v1820 = vadd.f32 0.0, %v1819
      %v1821 = vpop.f32.mrf.mxu0
      %v1822 = vadd.f32 0.0, %v1821
      %1823 = vdwg.mxu0
      %1824 = vmatpush.bf16.msra.mxu0 %v1758
      %1825 = vmatpush.bf16.msra.mxu0 %v1757
      %1826 = vmatpush.bf16.msra.mxu0 %v1756
      %1827 = vmatpush.bf16.msra.mxu0 %v1755
      %1828 = vmatpush.bf16.msra.mxu0 %v1754
      %1829 = vmatpush.bf16.msra.mxu0 %v1753
      %1830 = vmatpush.bf16.msra.mxu0 %v1752
      %1831 = vmatpush.bf16.msra.mxu0 %v1751
      %1832 = vmatmul.bf16.gmra.mxu0 %v1632
      %v1833 = vpop.f32.mrf.mxu0
      %v1834 = vadd.f32 %v1785, %v1833
      %v1835 = vpop.f32.mrf.mxu0
      %v1836 = vadd.f32 %v1787, %v1835
      %1837 = vmatmul.bf16.gmra.mxu0 %v1634
      %v1838 = vpop.f32.mrf.mxu0
      %v1839 = vadd.f32 %v1790, %v1838
      %v1840 = vpop.f32.mrf.mxu0
      %v1841 = vadd.f32 %v1792, %v1840
      %1842 = vmatmul.bf16.gmra.mxu0 %v1636
      %v1843 = vpop.f32.mrf.mxu0
      %v1844 = vadd.f32 %v1795, %v1843
      %v1845 = vpop.f32.mrf.mxu0
      %v1846 = vadd.f32 %v1797, %v1845
      %1847 = vmatmul.bf16.gmra.mxu0 %v1638
      %v1848 = vpop.f32.mrf.mxu0
      %v1849 = vadd.f32 %v1800, %v1848
      %v1850 = vpop.f32.mrf.mxu0
      %v1851 = vadd.f32 %v1802, %v1850
      %1852 = vmatmul.bf16.gmra.mxu0 %v1640
      %v1853 = vpop.f32.mrf.mxu0
      %v1854 = vadd.f32 %v1805, %v1853
      %v1855 = vpop.f32.mrf.mxu0
      %v1856 = vadd.f32 %v1807, %v1855
      %1857 = vmatmul.bf16.gmra.mxu0 %v1642
      %v1858 = vpop.f32.mrf.mxu0
      %v1859 = vadd.f32 %v1810, %v1858
      %v1860 = vpop.f32.mrf.mxu0
      %v1861 = vadd.f32 %v1812, %v1860
      %1862 = vmatmul.bf16.gmra.mxu0 %v1644
      %v1863 = vpop.f32.mrf.mxu0
      %v1864 = vadd.f32 %v1815, %v1863
      %v1865 = vpop.f32.mrf.mxu0
      %v1866 = vadd.f32 %v1817, %v1865
      %1867 = vmatmul.bf16.gmra.mxu0 %v1646
      %v1868 = vpop.f32.mrf.mxu0
      %v1869 = vadd.f32 %v1820, %v1868
      %v1870 = vpop.f32.mrf.mxu0
      %v1871 = vadd.f32 %v1822, %v1870
      %1872 = vdwg.mxu0
      %v1873 = vadd.f32 %v1375, %v1834
      %v1874 = vadd.f32 %v1376, %v1836
      %v1875 = vadd.f32 %v1377, %v1839
      %v1876 = vadd.f32 %v1378, %v1841
      %v1877 = vadd.f32 %v1379, %v1844
      %v1878 = vadd.f32 %v1380, %v1846
      %v1879 = vadd.f32 %v1381, %v1849
      %v1880 = vadd.f32 %v1382, %v1851
      %v1881 = vadd.f32 %v1383, %v1854
      %v1882 = vadd.f32 %v1384, %v1856
      %v1883 = vadd.f32 %v1385, %v1859
      %v1884 = vadd.f32 %v1386, %v1861
      %v1885 = vadd.f32 %v1387, %v1864
      %v1886 = vadd.f32 %v1388, %v1866
      %v1887 = vadd.f32 %v1389, %v1869
      %v1888 = vadd.f32 %v1390, %v1871
      %v1889 = vld [vmem:[%s9] sm:$0x1]
      %v1891 = vperm.slane %v1889, 0
      %v1893 = vadd.f32 %v1873, %v1891
      %v1894 = vadd.f32 %v1874, %v1891
      %v1895 = vadd.f32 %v1875, %v1891
      %v1896 = vadd.f32 %v1876, %v1891
      %v1897 = vadd.f32 %v1877, %v1891
      %v1898 = vadd.f32 %v1878, %v1891
      %v1899 = vadd.f32 %v1879, %v1891
      %v1900 = vadd.f32 %v1880, %v1891
      %v1901 = vadd.f32 %v1881, %v1891
      %v1902 = vadd.f32 %v1882, %v1891
      %v1903 = vadd.f32 %v1883, %v1891
      %v1904 = vadd.f32 %v1884, %v1891
      %v1905 = vadd.f32 %v1885, %v1891
      %v1906 = vadd.f32 %v1886, %v1891
      %v1907 = vadd.f32 %v1887, %v1891
      %v1908 = vadd.f32 %v1888, %v1891
      %1909 = vst [vmem:[#allocation16] sm:$0xff] %v1893
      %1910 = vst [vmem:[#allocation16 + $0x8] sm:$0xff] %v1894
      %1911 = vst [vmem:[#allocation16 + $0x10] sm:$0xff] %v1895
      %1912 = vst [vmem:[#allocation16 + $0x18] sm:$0xff] %v1896
      %1913 = vst [vmem:[#allocation16 + $0x20] sm:$0xff] %v1897
      %1914 = vst [vmem:[#allocation16 + $0x28] sm:$0xff] %v1898
      %1915 = vst [vmem:[#allocation16 + $0x30] sm:$0xff] %v1899
      %1916 = vst [vmem:[#allocation16 + $0x38] sm:$0xff] %v1900
      %1917 = vst [vmem:[#allocation16 + $0x40] sm:$0xff] %v1901
      %1918 = vst [vmem:[#allocation16 + $0x48] sm:$0xff] %v1902
      %1919 = vst [vmem:[#allocation16 + $0x50] sm:$0xff] %v1903
      %1920 = vst [vmem:[#allocation16 + $0x58] sm:$0xff] %v1904
      %1921 = vst [vmem:[#allocation16 + $0x60] sm:$0xff] %v1905
      %1922 = vst [vmem:[#allocation16 + $0x68] sm:$0xff] %v1906
      %1923 = vst [vmem:[#allocation16 + $0x70] sm:$0xff] %v1907
      %1924 = vst [vmem:[#allocation16 + $0x78] sm:$0xff] %v1908
    $region73: #{tpu_custom_call.1} parent=1 // pred_fallthru
      _
    // Predicated region
    $region74: #{tpu_custom_call.1} parent=1 // pred_check
      _
    $region75: #{tpu_custom_call.1} parent=1 // pred_check_branch
      %1926 = sbr.rel (0) target = $region77
    $region76: #{tpu_custom_call.1} parent=1 // pred_region
      %1928 = vsyncadd [#allocation7], 0
      %s1929 = sshll.u32 [#allocation16], 4
      %s1930 = int_to_ptr.vmem [resolvable:$true] %s1929
      %s1931 = sshll.u32 %s10, 4
      %s1932 = int_to_ptr.hbm [resolvable:$true] %s1931
      %1937 = dma.vmem_to_hbm [thread:$0]  %s1930, 2048, %s1932, [#allocation7], 128, 128, 8
    $region77: #{tpu_custom_call.1} parent=1 // pred_fallthru
      _
    // Predicated region
    $region78: #{tpu_custom_call.1} parent=1 // pred_check
      _
    $region79: #{tpu_custom_call.1} parent=1 // pred_check_branch
      %1939 = sbr.rel (0) target = $region81
    $region80: #{tpu_custom_call.1} parent=1 // pred_region
      %1941 = dma.done [#allocation7], 2048
    $region81: #{tpu_custom_call.1} parent=1 // pred_fallthru
      _
    %1942 = vsyncpa [#allocation6], 1
    %1943 = vsyncpa [#allocation9], 1
    %1944 = vsyncpa [#allocation12], 1
    %1945 = vsyncpa [#allocation15], 1
    %1946 = vsyncpa [#allocation7], 1

</llo_original>
